<compile_context>
chip_gen: v7x
topology: tpu7x:2x2x1
jax: 0.10.0
libtpu: 0.0.40
codegen_flags: <defaults>
</compile_context>

<pallas_src>
import functools

import numpy as np
import jax
import jax.numpy as jnp
from jax.experimental import pallas as pl
from jax.experimental.pallas import tpu as pltpu

VMEM = pltpu.MemorySpace.VMEM
_CW = 128  # padded per-channel lane width


# --------------------------------------------------------------------------- #
# fused Generator kernel
# --------------------------------------------------------------------------- #
def _generator_kernel(x_ref, w1_ref, b1_ref, w2_ref, b2_ref, w3_ref, b3_ref,
                      wh_ref, bh_ref, g_ref, m_edges_ref, q_nodes_ref,
                      nodes_ref, edges_ref, *, N, T, Y, CW):
    f32 = jnp.float32
    EW = Y * CW  # width of the (padded) edge section of the fused head

    # ---- 3-layer tanh MLP trunk (nn.Dropout = identity in eval mode) -------
    h = jnp.tanh(jnp.dot(x_ref[...], w1_ref[...], preferred_element_type=f32)
                 + b1_ref[...])
    h = jnp.tanh(jnp.dot(h, w2_ref[...], preferred_element_type=f32)
                 + b2_ref[...])
    h = jnp.tanh(jnp.dot(h, w3_ref[...], preferred_element_type=f32)
                 + b3_ref[...])

    # ---- fused, channel-padded output heads (symmetrization pre-folded) ----
    head = jnp.dot(h, wh_ref[...], preferred_element_type=f32) + bh_ref[...]

    # ---- add Gumbel noise (already in the padded layout).  NOTE: tau scaling
    # is dropped — the hard (argmax) gumbel-softmax forward value is invariant
    # to dividing the noisy logits by a positive temperature. --------------- #
    noisy = head + g_ref[...]

    # ---- hard gumbel-softmax: first-max-wins argmax -> bf16 one-hot --------
    # Channel slices are 128-lane aligned (whole vregs); padded positions hold
    # garbage but their relayout-matrix rows are zero, so they never leak.
    def channel_onehot(y, num_channels, offset):
        best = y[:, offset:offset + CW]
        idx = jnp.zeros_like(best)
        for c in range(1, num_channels):
            cur = y[:, offset + c * CW: offset + (c + 1) * CW]
            take = cur > best
            best = jnp.where(take, cur, best)
            idx = jnp.where(take, jnp.float32(c), idx)
        return jnp.concatenate(
            [(idx == jnp.float32(c)).astype(jnp.bfloat16)
             for c in range(num_channels)], axis=-1)

    edge_oh = channel_onehot(noisy, Y, 0)    # (B, Y*CW) bf16, channel-first
    node_oh = channel_onehot(noisy, T, EW)   # (B, T*CW) bf16, channel-first

    # ---- MXU relayout to PyTorch flat layouts (m_edges also does permute4D)
    edges_ref[...] = jnp.dot(edge_oh, m_edges_ref[...],
                             preferred_element_type=f32)   # (B, N*N*Y)
    nodes_ref[...] = jnp.dot(node_oh, q_nodes_ref[...],
                             preferred_element_type=f32)   # (B, CW) lane-dense


# --------------------------------------------------------------------------- #
# host-side static relayout constants (depend only on N, T, Y)
# --------------------------------------------------------------------------- #
def _build_relayout_constants(N, T, Y, CW=_CW):
    # m_edges: row (y*CW + n1*N + n2) of the padded channel-first edge one-hot
    #          -> output columns (n1,n2,y) and (n2,n1,y) of the flat (N,N,Y)
    #          layout, kept only for the strict upper triangle (permute4D).
    m_edges = np.zeros((Y * CW, N * N * Y), np.float32)
    for y in range(Y):
        for a in range(N):
            for b in range(N):
                if a < b:
                    r = y * CW + a * N + b
                    m_edges[r, a * N * Y + b * Y + y] = 1.0
                    m_edges[r, b * N * Y + a * Y + y] = 1.0
    # q_nodes: row (t*CW + n) of the padded channel-first node one-hot
    #          -> output column n*T + t of the flat (N,T) layout
    #          (output padded to CW lanes for an unmasked store).
    q_nodes = np.zeros((T * CW, CW), np.float32)
    for t in range(T):
        for n in range(N):
            q_nodes[t * CW + n, n * T + t] = 1.0
    return (jnp.asarray(m_edges, jnp.bfloat16),
            jnp.asarray(q_nodes, jnp.bfloat16))


# --------------------------------------------------------------------------- #
# parameters (deterministic, synthetic) + wrapper
# --------------------------------------------------------------------------- #
def init_params(key, z_dim, h1, h2, h3, N, T, Y, CW=_CW):
    ks = jax.random.split(key, 10)

    def lin(kw, kb, fan_in, fan_out):
        bound = 1.0 / float(fan_in) ** 0.5
        w = jax.random.uniform(kw, (fan_in, fan_out), jnp.float32, -bound, bound)
        b = jax.random.uniform(kb, (fan_out,), jnp.float32, -bound, bound)
        return w, b

    w1, b1 = lin(ks[0], ks[1], z_dim, h1)
    w2, b2 = lin(ks[2], ks[3], h1, h2)
    w3, b3 = lin(ks[4], ks[5], h2, h3)
    wn, bn = lin(ks[6], ks[7], h3, N * T)        # PyTorch column order (n, t)
    we, be = lin(ks[8], ks[9], h3, N * N * Y)    # PyTorch column order (n1, n2, y)

    # fold edge-logit symmetrization 0.5*(E + E^T over (n1,n2)) into the head
    we_r = we.reshape(h3, N, N, Y)
    we_sym = 0.5 * (we_r + we_r.transpose(0, 2, 1, 3))
    be_r = be.reshape(N, N, Y)
    be_sym = 0.5 * (be_r + be_r.transpose(1, 0, 2))

    # channel-first packing, each channel padded to CW (=128) lanes
    we_cf = we_sym.transpose(0, 3, 1, 2).reshape(h3, Y, N * N)   # (h3, Y, NN)
    be_cf = be_sym.transpose(2, 0, 1).reshape(Y, N * N)
    wn_cf = wn.reshape(h3, N, T).transpose(0, 2, 1)              # (h3, T, N)
    bn_cf = bn.reshape(N, T).transpose(1, 0)

    we_pad = jnp.zeros((h3, Y, CW), jnp.float32).at[:, :, :N * N].set(we_cf)
    be_pad = jnp.zeros((Y, CW), jnp.float32).at[:, :N * N].set(be_cf)
    wn_pad = jnp.zeros((h3, T, CW), jnp.float32).at[:, :, :N].set(wn_cf)
    bn_pad = jnp.zeros((T, CW), jnp.float32).at[:, :N].set(bn_cf)

    w_head = jnp.concatenate([we_pad.reshape(h3, Y * CW),
                              wn_pad.reshape(h3, T * CW)], axis=1)
    b_head = jnp.concatenate([be_pad.reshape(Y * CW),
                              bn_pad.reshape(T * CW)])[None, :]

    m_edges, q_nodes = _build_relayout_constants(N, T, Y, CW)

    return dict(w1=w1, b1=b1[None, :], w2=w2, b2=b2[None, :],
                w3=w3, b3=b3[None, :], w_head=w_head, b_head=b_head,
                m_edges=m_edges, q_nodes=q_nodes)


@functools.partial(jax.jit, static_argnames=("N", "T", "Y", "temp"))
def generator_forward(params, x, noise_key, *, N, T, Y, temp=1.0):
    """Generator forward pass.  `temp` kept for API parity (unused: the hard
    gumbel-softmax one-hot output is invariant to the temperature)."""
    B = x.shape[0]
    CW = _CW
    head_width = (Y + T) * CW
    # Gumbel noise drawn outside the kernel (interpret-safe), directly in the
    # padded head layout so no lane-offset slicing is needed in the kernel.
    g = jax.random.gumbel(noise_key, (B, head_width), jnp.float32)

    kernel = functools.partial(_generator_kernel, N=N, T=T, Y=Y, CW=CW)
    nodes_pad, edges_flat = pl.pallas_call(
        kernel,
        out_shape=(jax.ShapeDtypeStruct((B, CW), jnp.float32),
                   jax.ShapeDtypeStruct((B, N * N * Y), jnp.float32)),
        in_specs=[pl.BlockSpec(memory_space=VMEM)] * 12,
        out_specs=(pl.BlockSpec(memory_space=VMEM),
                   pl.BlockSpec(memory_space=VMEM)),
    )(x, params["w1"], params["b1"], params["w2"], params["b2"],
      params["w3"], params["b3"], params["w_head"], params["b_head"],
      g, params["m_edges"], params["q_nodes"])

    # free wrapper-side reshapes into the PyTorch output layout
    nodes = nodes_pad[:, :N * T].reshape(B, N, T)    # (B, N, T)
    edges = edges_flat.reshape(B, N, N, Y)           # (B, N, N, Y)
    return nodes, edges


if __name__ == "__main__":
    # config: z_dim=16, h1_g=32, h2_g=32, h3_g=32, temp=0.75, nonlinearity_G='tanh'
    B, Z_DIM, H1, H2, H3 = 2, 16, 32, 32, 32
    N, T, Y = 8, 5, 4
    TEMP = 0.75

    root = jax.random.PRNGKey(0)
    k_param, k_x, k_noise = jax.random.split(root, 3)

    params = init_params(k_param, Z_DIM, H1, H2, H3, N, T, Y)
    x = jax.random.normal(k_x, (B, Z_DIM), jnp.float32)

    nodes, edges = generator_forward(params, x, k_noise, N=N, T=T, Y=Y, temp=TEMP)
    nodes, edges = jax.block_until_ready((nodes, edges))

    # sanity checks on the forward-pass semantics
    assert nodes.shape == (B, N, T)
    assert edges.shape == (B, N, N, Y)
    assert jnp.allclose(nodes.sum(-1), 1.0)                         # one-hot atom types
    assert jnp.allclose(edges, jnp.swapaxes(edges, 1, 2))           # symmetric adjacency
    diag = edges[:, jnp.arange(N), jnp.arange(N), :]
    assert jnp.allclose(diag, 0.0)                                  # zero diagonal
    offdiag = edges.sum(-1) + jnp.eye(N)[None]                      # off-diag rows one-hot
    assert jnp.allclose(offdiag, jnp.ones((B, N, N)))

    print("KERNEL_OK")
</pallas_src>

<mosaic_0001>
module attributes {stable_mosaic.version = 11 : i64} {
  func.func @_generator_kernel(%arg0: memref<2x16xf32, #tpu.memory_space<vmem>>, %arg1: memref<16x32xf32, #tpu.memory_space<vmem>>, %arg2: memref<1x32xf32, #tpu.memory_space<vmem>>, %arg3: memref<32x32xf32, #tpu.memory_space<vmem>>, %arg4: memref<1x32xf32, #tpu.memory_space<vmem>>, %arg5: memref<32x32xf32, #tpu.memory_space<vmem>>, %arg6: memref<1x32xf32, #tpu.memory_space<vmem>>, %arg7: memref<32x1152xf32, #tpu.memory_space<vmem>>, %arg8: memref<1x1152xf32, #tpu.memory_space<vmem>>, %arg9: memref<2x1152xf32, #tpu.memory_space<vmem>>, %arg10: memref<512x256xbf16, #tpu.memory_space<vmem>>, %arg11: memref<640x128xbf16, #tpu.memory_space<vmem>>, %arg12: memref<2x128xf32, #tpu.memory_space<vmem>>, %arg13: memref<2x256xf32, #tpu.memory_space<vmem>>) attributes {dimension_semantics = [], scalar_prefetch = 0 : i64, scratch_operands = 0 : i64, tpu.core_type = #tpu.core_type<tc>} {
    %c0 = arith.constant 0 : index
    %c0_0 = arith.constant 0 : index
    %0 = vector.load %arg0[%c0, %c0_0] : memref<2x16xf32, #tpu.memory_space<vmem>>, vector<2x16xf32>
    %c0_1 = arith.constant 0 : index
    %c0_2 = arith.constant 0 : index
    %1 = vector.load %arg1[%c0_1, %c0_2] : memref<16x32xf32, #tpu.memory_space<vmem>>, vector<16x32xf32>
    %cst = arith.constant dense<0.000000e+00> : vector<2x32xf32>
    %2 = tpu.matmul %0, %1, %cst {dimension_numbers = #tpu.dot_dimension_numbers<[1], [0], [0], [1], [0, 0, 1, 1], [], []>} : vector<2x16xf32>, vector<16x32xf32>, vector<2x32xf32> -> vector<2x32xf32>
    %c0_3 = arith.constant 0 : index
    %c0_4 = arith.constant 0 : index
    %3 = vector.load %arg2[%c0_3, %c0_4] : memref<1x32xf32, #tpu.memory_space<vmem>>, vector<1x32xf32>
    %4 = vector.broadcast %3 : vector<1x32xf32> to vector<2x32xf32>
    %5 = arith.addf %2, %4 : vector<2x32xf32>
    %6 = math.tanh %5 : vector<2x32xf32>
    %c0_5 = arith.constant 0 : index
    %c0_6 = arith.constant 0 : index
    %7 = vector.load %arg3[%c0_5, %c0_6] : memref<32x32xf32, #tpu.memory_space<vmem>>, vector<32x32xf32>
    %cst_7 = arith.constant dense<0.000000e+00> : vector<2x32xf32>
    %8 = tpu.matmul %6, %7, %cst_7 {dimension_numbers = #tpu.dot_dimension_numbers<[1], [0], [0], [1], [0, 0, 1, 1], [], []>} : vector<2x32xf32>, vector<32x32xf32>, vector<2x32xf32> -> vector<2x32xf32>
    %c0_8 = arith.constant 0 : index
    %c0_9 = arith.constant 0 : index
    %9 = vector.load %arg4[%c0_8, %c0_9] : memref<1x32xf32, #tpu.memory_space<vmem>>, vector<1x32xf32>
    %10 = vector.broadcast %9 : vector<1x32xf32> to vector<2x32xf32>
    %11 = arith.addf %8, %10 : vector<2x32xf32>
    %12 = math.tanh %11 : vector<2x32xf32>
    %c0_10 = arith.constant 0 : index
    %c0_11 = arith.constant 0 : index
    %13 = vector.load %arg5[%c0_10, %c0_11] : memref<32x32xf32, #tpu.memory_space<vmem>>, vector<32x32xf32>
    %cst_12 = arith.constant dense<0.000000e+00> : vector<2x32xf32>
    %14 = tpu.matmul %12, %13, %cst_12 {dimension_numbers = #tpu.dot_dimension_numbers<[1], [0], [0], [1], [0, 0, 1, 1], [], []>} : vector<2x32xf32>, vector<32x32xf32>, vector<2x32xf32> -> vector<2x32xf32>
    %c0_13 = arith.constant 0 : index
    %c0_14 = arith.constant 0 : index
    %15 = vector.load %arg6[%c0_13, %c0_14] : memref<1x32xf32, #tpu.memory_space<vmem>>, vector<1x32xf32>
    %16 = vector.broadcast %15 : vector<1x32xf32> to vector<2x32xf32>
    %17 = arith.addf %14, %16 : vector<2x32xf32>
    %18 = math.tanh %17 : vector<2x32xf32>
    %c0_15 = arith.constant 0 : index
    %c0_16 = arith.constant 0 : index
    %19 = vector.load %arg7[%c0_15, %c0_16] : memref<32x1152xf32, #tpu.memory_space<vmem>>, vector<32x1152xf32>
    %cst_17 = arith.constant dense<0.000000e+00> : vector<2x1152xf32>
    %20 = tpu.matmul %18, %19, %cst_17 {dimension_numbers = #tpu.dot_dimension_numbers<[1], [0], [0], [1], [0, 0, 1, 1], [], []>} : vector<2x32xf32>, vector<32x1152xf32>, vector<2x1152xf32> -> vector<2x1152xf32>
    %c0_18 = arith.constant 0 : index
    %c0_19 = arith.constant 0 : index
    %21 = vector.load %arg8[%c0_18, %c0_19] : memref<1x1152xf32, #tpu.memory_space<vmem>>, vector<1x1152xf32>
    %22 = vector.broadcast %21 : vector<1x1152xf32> to vector<2x1152xf32>
    %23 = arith.addf %20, %22 : vector<2x1152xf32>
    %c0_20 = arith.constant 0 : index
    %c0_21 = arith.constant 0 : index
    %24 = vector.load %arg9[%c0_20, %c0_21] : memref<2x1152xf32, #tpu.memory_space<vmem>>, vector<2x1152xf32>
    %25 = arith.addf %23, %24 : vector<2x1152xf32>
    %26 = vector.extract_strided_slice %25 {offsets = [0, 0], sizes = [2, 128], strides = [1, 1]} : vector<2x1152xf32> to vector<2x128xf32>
    %cst_22 = arith.constant 0.000000e+00 : f32
    %27 = vector.broadcast %cst_22 : f32 to vector<2x128xf32>
    %28 = vector.extract_strided_slice %25 {offsets = [0, 128], sizes = [2, 128], strides = [1, 1]} : vector<2x1152xf32> to vector<2x128xf32>
    %29 = arith.cmpf ogt, %28, %26 : vector<2x128xf32>
    %30 = arith.select %29, %28, %26 : vector<2x128xi1>, vector<2x128xf32>
    %cst_23 = arith.constant 1.000000e+00 : f32
    %31 = vector.broadcast %cst_23 : f32 to vector<2x128xf32>
    %32 = arith.select %29, %31, %27 : vector<2x128xi1>, vector<2x128xf32>
    %33 = vector.extract_strided_slice %25 {offsets = [0, 256], sizes = [2, 128], strides = [1, 1]} : vector<2x1152xf32> to vector<2x128xf32>
    %34 = arith.cmpf ogt, %33, %30 : vector<2x128xf32>
    %35 = arith.select %34, %33, %30 : vector<2x128xi1>, vector<2x128xf32>
    %cst_24 = arith.constant 2.000000e+00 : f32
    %36 = vector.broadcast %cst_24 : f32 to vector<2x128xf32>
    %37 = arith.select %34, %36, %32 : vector<2x128xi1>, vector<2x128xf32>
    %38 = vector.extract_strided_slice %25 {offsets = [0, 384], sizes = [2, 128], strides = [1, 1]} : vector<2x1152xf32> to vector<2x128xf32>
    %39 = arith.cmpf ogt, %38, %35 : vector<2x128xf32>
    %cst_25 = arith.constant 3.000000e+00 : f32
    %40 = vector.broadcast %cst_25 : f32 to vector<2x128xf32>
    %41 = arith.select %39, %40, %37 : vector<2x128xi1>, vector<2x128xf32>
    %cst_26 = arith.constant 0.000000e+00 : f32
    %42 = vector.broadcast %cst_26 : f32 to vector<2x128xf32>
    %43 = arith.cmpf oeq, %41, %42 : vector<2x128xf32>
    %44 = arith.extui %43 : vector<2x128xi1> to vector<2x128xi32>
    %45 = arith.sitofp %44 : vector<2x128xi32> to vector<2x128xf32>
    %46 = arith.truncf %45 : vector<2x128xf32> to vector<2x128xbf16>
    %cst_27 = arith.constant 1.000000e+00 : f32
    %47 = vector.broadcast %cst_27 : f32 to vector<2x128xf32>
    %48 = arith.cmpf oeq, %41, %47 : vector<2x128xf32>
    %49 = arith.extui %48 : vector<2x128xi1> to vector<2x128xi32>
    %50 = arith.sitofp %49 : vector<2x128xi32> to vector<2x128xf32>
    %51 = arith.truncf %50 : vector<2x128xf32> to vector<2x128xbf16>
    %cst_28 = arith.constant 2.000000e+00 : f32
    %52 = vector.broadcast %cst_28 : f32 to vector<2x128xf32>
    %53 = arith.cmpf oeq, %41, %52 : vector<2x128xf32>
    %54 = arith.extui %53 : vector<2x128xi1> to vector<2x128xi32>
    %55 = arith.sitofp %54 : vector<2x128xi32> to vector<2x128xf32>
    %56 = arith.truncf %55 : vector<2x128xf32> to vector<2x128xbf16>
    %cst_29 = arith.constant 3.000000e+00 : f32
    %57 = vector.broadcast %cst_29 : f32 to vector<2x128xf32>
    %58 = arith.cmpf oeq, %41, %57 : vector<2x128xf32>
    %59 = arith.extui %58 : vector<2x128xi1> to vector<2x128xi32>
    %60 = arith.sitofp %59 : vector<2x128xi32> to vector<2x128xf32>
    %61 = arith.truncf %60 : vector<2x128xf32> to vector<2x128xbf16>
    %62 = tpu.concatenate %46, %51, %56, %61 in 1 : vector<2x128xbf16>, vector<2x128xbf16>, vector<2x128xbf16>, vector<2x128xbf16> -> vector<2x512xbf16>
    %63 = vector.extract_strided_slice %25 {offsets = [0, 512], sizes = [2, 128], strides = [1, 1]} : vector<2x1152xf32> to vector<2x128xf32>
    %cst_30 = arith.constant 0.000000e+00 : f32
    %64 = vector.broadcast %cst_30 : f32 to vector<2x128xf32>
    %65 = vector.extract_strided_slice %25 {offsets = [0, 640], sizes = [2, 128], strides = [1, 1]} : vector<2x1152xf32> to vector<2x128xf32>
    %66 = arith.cmpf ogt, %65, %63 : vector<2x128xf32>
    %67 = arith.select %66, %65, %63 : vector<2x128xi1>, vector<2x128xf32>
    %cst_31 = arith.constant 1.000000e+00 : f32
    %68 = vector.broadcast %cst_31 : f32 to vector<2x128xf32>
    %69 = arith.select %66, %68, %64 : vector<2x128xi1>, vector<2x128xf32>
    %70 = vector.extract_strided_slice %25 {offsets = [0, 768], sizes = [2, 128], strides = [1, 1]} : vector<2x1152xf32> to vector<2x128xf32>
    %71 = arith.cmpf ogt, %70, %67 : vector<2x128xf32>
    %72 = arith.select %71, %70, %67 : vector<2x128xi1>, vector<2x128xf32>
    %cst_32 = arith.constant 2.000000e+00 : f32
    %73 = vector.broadcast %cst_32 : f32 to vector<2x128xf32>
    %74 = arith.select %71, %73, %69 : vector<2x128xi1>, vector<2x128xf32>
    %75 = vector.extract_strided_slice %25 {offsets = [0, 896], sizes = [2, 128], strides = [1, 1]} : vector<2x1152xf32> to vector<2x128xf32>
    %76 = arith.cmpf ogt, %75, %72 : vector<2x128xf32>
    %77 = arith.select %76, %75, %72 : vector<2x128xi1>, vector<2x128xf32>
    %cst_33 = arith.constant 3.000000e+00 : f32
    %78 = vector.broadcast %cst_33 : f32 to vector<2x128xf32>
    %79 = arith.select %76, %78, %74 : vector<2x128xi1>, vector<2x128xf32>
    %80 = vector.extract_strided_slice %25 {offsets = [0, 1024], sizes = [2, 128], strides = [1, 1]} : vector<2x1152xf32> to vector<2x128xf32>
    %81 = arith.cmpf ogt, %80, %77 : vector<2x128xf32>
    %cst_34 = arith.constant 4.000000e+00 : f32
    %82 = vector.broadcast %cst_34 : f32 to vector<2x128xf32>
    %83 = arith.select %81, %82, %79 : vector<2x128xi1>, vector<2x128xf32>
    %cst_35 = arith.constant 0.000000e+00 : f32
    %84 = vector.broadcast %cst_35 : f32 to vector<2x128xf32>
    %85 = arith.cmpf oeq, %83, %84 : vector<2x128xf32>
    %86 = arith.extui %85 : vector<2x128xi1> to vector<2x128xi32>
    %87 = arith.sitofp %86 : vector<2x128xi32> to vector<2x128xf32>
    %88 = arith.truncf %87 : vector<2x128xf32> to vector<2x128xbf16>
    %cst_36 = arith.constant 1.000000e+00 : f32
    %89 = vector.broadcast %cst_36 : f32 to vector<2x128xf32>
    %90 = arith.cmpf oeq, %83, %89 : vector<2x128xf32>
    %91 = arith.extui %90 : vector<2x128xi1> to vector<2x128xi32>
    %92 = arith.sitofp %91 : vector<2x128xi32> to vector<2x128xf32>
    %93 = arith.truncf %92 : vector<2x128xf32> to vector<2x128xbf16>
    %cst_37 = arith.constant 2.000000e+00 : f32
    %94 = vector.broadcast %cst_37 : f32 to vector<2x128xf32>
    %95 = arith.cmpf oeq, %83, %94 : vector<2x128xf32>
    %96 = arith.extui %95 : vector<2x128xi1> to vector<2x128xi32>
    %97 = arith.sitofp %96 : vector<2x128xi32> to vector<2x128xf32>
    %98 = arith.truncf %97 : vector<2x128xf32> to vector<2x128xbf16>
    %cst_38 = arith.constant 3.000000e+00 : f32
    %99 = vector.broadcast %cst_38 : f32 to vector<2x128xf32>
    %100 = arith.cmpf oeq, %83, %99 : vector<2x128xf32>
    %101 = arith.extui %100 : vector<2x128xi1> to vector<2x128xi32>
    %102 = arith.sitofp %101 : vector<2x128xi32> to vector<2x128xf32>
    %103 = arith.truncf %102 : vector<2x128xf32> to vector<2x128xbf16>
    %cst_39 = arith.constant 4.000000e+00 : f32
    %104 = vector.broadcast %cst_39 : f32 to vector<2x128xf32>
    %105 = arith.cmpf oeq, %83, %104 : vector<2x128xf32>
    %106 = arith.extui %105 : vector<2x128xi1> to vector<2x128xi32>
    %107 = arith.sitofp %106 : vector<2x128xi32> to vector<2x128xf32>
    %108 = arith.truncf %107 : vector<2x128xf32> to vector<2x128xbf16>
    %109 = tpu.concatenate %88, %93, %98, %103, %108 in 1 : vector<2x128xbf16>, vector<2x128xbf16>, vector<2x128xbf16>, vector<2x128xbf16>, vector<2x128xbf16> -> vector<2x640xbf16>
    %c0_40 = arith.constant 0 : index
    %c0_41 = arith.constant 0 : index
    %110 = vector.load %arg10[%c0_40, %c0_41] : memref<512x256xbf16, #tpu.memory_space<vmem>>, vector<512x256xbf16>
    %cst_42 = arith.constant dense<0.000000e+00> : vector<2x256xf32>
    %111 = tpu.matmul %62, %110, %cst_42 {dimension_numbers = #tpu.dot_dimension_numbers<[1], [0], [0], [1], [0, 0, 1, 1], [], []>} : vector<2x512xbf16>, vector<512x256xbf16>, vector<2x256xf32> -> vector<2x256xf32>
    %c0_43 = arith.constant 0 : index
    %c0_44 = arith.constant 0 : index
    %112 = vector.load %arg13[%c0_43, %c0_44] : memref<2x256xf32, #tpu.memory_space<vmem>>, vector<2x256xf32>
    tpu.vector_store %arg13[%c0_43, %c0_44], %111 {strides = array<i32>} : memref<2x256xf32, #tpu.memory_space<vmem>>, vector<2x256xf32>,
    %c0_45 = arith.constant 0 : index
    %c0_46 = arith.constant 0 : index
    %113 = vector.load %arg11[%c0_45, %c0_46] : memref<640x128xbf16, #tpu.memory_space<vmem>>, vector<640x128xbf16>
    %cst_47 = arith.constant dense<0.000000e+00> : vector<2x128xf32>
    %114 = tpu.matmul %109, %113, %cst_47 {dimension_numbers = #tpu.dot_dimension_numbers<[1], [0], [0], [1], [0, 0, 1, 1], [], []>} : vector<2x640xbf16>, vector<640x128xbf16>, vector<2x128xf32> -> vector<2x128xf32>
    %c0_48 = arith.constant 0 : index
    %c0_49 = arith.constant 0 : index
    %115 = vector.load %arg12[%c0_48, %c0_49] : memref<2x128xf32, #tpu.memory_space<vmem>>, vector<2x128xf32>
    tpu.vector_store %arg12[%c0_48, %c0_49], %114 {strides = array<i32>} : memref<2x128xf32, #tpu.memory_space<vmem>>, vector<2x128xf32>,
    return
  }
}

</mosaic_0001>

<llo_original>
// kernel: generator_forward.1
$region0: #{generator_forward.1}
  #allocation0 [shape = 'u32[]', space=smem, size = 0x4, offset = 0x4, fixed_abs, tag = 'smem constant byte address 0x4 - core index']
  #allocation1 [shape = 'u32[144,128]{1,0:T(1,128)}', space=vmem, size = 0x12000, scoped, tag = 'internal scratch']
  %s0 = inlined_call_operand.hbm [shape: f32[2,16], index: 0, kind: input, shape index: {}]
  %s1 = inlined_call_operand.vmem [shape: f32[16,32], index: 1, kind: input, shape index: {}]
  %s2 = inlined_call_operand.vmem [shape: f32[1,32], index: 2, kind: input, shape index: {}]
  %s3 = inlined_call_operand.vmem [shape: f32[32,32], index: 3, kind: input, shape index: {}]
  %s4 = inlined_call_operand.vmem [shape: f32[1,32], index: 4, kind: input, shape index: {}]
  %s5 = inlined_call_operand.vmem [shape: f32[32,32], index: 5, kind: input, shape index: {}]
  %s6 = inlined_call_operand.vmem [shape: f32[1,32], index: 6, kind: input, shape index: {}]
  %s7 = inlined_call_operand.hbm [shape: f32[32,1152], index: 7, kind: input, shape index: {}]
  %s8 = inlined_call_operand.vmem [shape: f32[1,1152], index: 8, kind: input, shape index: {}]
  %s9 = inlined_call_operand.vmem [shape: f32[2,1152], index: 9, kind: input, shape index: {}]
  %s10 = inlined_call_operand.hbm [shape: bf16[512,256], index: 10, kind: input, shape index: {}]
  %s11 = inlined_call_operand.hbm [shape: bf16[640,128], index: 11, kind: input, shape index: {}]
  %s12 = inlined_call_operand.vmem [shape: f32[2,128], index: 12, kind: output, shape index: {0}]
  %s13 = inlined_call_operand.vmem [shape: f32[2,256], index: 13, kind: output, shape index: {1}]
  %14 = xla_tuple %s12, %s13
  %s15 = sld [smem:[#allocation0]]
  $region82: #{generator_forward.1} parent=0
    _
  %s17 = ssub.s32 1, %s15
  %s18 = scalar_select 0, %s17, %s15
  $region1: #{generator_forward.1} parent=0
    #allocation2 [shape = 'u8[1024]{0}', space=vmem, size = 0x400, scoped, tag = 'input window, operand 0, single buffered']
    #allocation3 [shape = 's32[1]{0}', space=sflag, size = 0x4, scoped, tag = 'scoped memory for generator_forward.1']
    #allocation4 [shape = 'u8[147456]{0}', space=vmem, size = 0x24000, scoped, tag = 'input window, operand 7, single buffered']
    #allocation5 [shape = 's32[1]{0}', space=sflag, size = 0x4, scoped, tag = 'scoped memory for generator_forward.1']
    #allocation6 [shape = 'u8[262144]{0}', space=vmem, size = 0x40000, scoped, tag = 'input window, operand 10, single buffered']
    #allocation7 [shape = 'u8[163840]{0}', space=vmem, size = 0x28000, scoped, tag = 'input window, operand 11, single buffered']
    #allocation8 [shape = 's32[1]{0}', space=sflag, size = 0x4, scoped, tag = 'scoped memory for generator_forward.1']
    %19 = vsyncpa [#allocation3], 0
    %20 = vsyncpa [#allocation5], 0
    %21 = vsyncpa [#allocation8], 0
    // Predicated region
    $region2: #{generator_forward.1} parent=1 // pred_check
      _
    $region3: #{generator_forward.1} parent=1 // pred_check_branch
      %23 = sbr.rel (0) target = $region5
    $region4: #{generator_forward.1} parent=1 // pred_region
      %s25 = ssub.s32 32, 32
      %26 = vsyncadd [#allocation3], %s25
      %s28 = sshll.u32 [#allocation2], 4
      %s29 = int_to_ptr.vmem [resolvable:$true] %s28
      %31 = dma.hbm_to_vmem [thread:$0]  %s0, 32, %s29, [#allocation3]
    $region5: #{generator_forward.1} parent=1 // pred_fallthru
      _
    // Predicated region
    $region6: #{generator_forward.1} parent=1 // pred_check
      _
    $region7: #{generator_forward.1} parent=1 // pred_check_branch
      %33 = sbr.rel (0) target = $region9
    $region8: #{generator_forward.1} parent=1 // pred_region
      _
    $region9: #{generator_forward.1} parent=1 // pred_fallthru
      _
    // Predicated region
    $region10: #{generator_forward.1} parent=1 // pred_check
      _
    $region11: #{generator_forward.1} parent=1 // pred_check_branch
      %35 = sbr.rel (0) target = $region13
    $region12: #{generator_forward.1} parent=1 // pred_region
      _
    $region13: #{generator_forward.1} parent=1 // pred_fallthru
      _
    // Predicated region
    $region14: #{generator_forward.1} parent=1 // pred_check
      _
    $region15: #{generator_forward.1} parent=1 // pred_check_branch
      %37 = sbr.rel (0) target = $region17
    $region16: #{generator_forward.1} parent=1 // pred_region
      _
    $region17: #{generator_forward.1} parent=1 // pred_fallthru
      _
    // Predicated region
    $region18: #{generator_forward.1} parent=1 // pred_check
      _
    $region19: #{generator_forward.1} parent=1 // pred_check_branch
      %39 = sbr.rel (0) target = $region21
    $region20: #{generator_forward.1} parent=1 // pred_region
      _
    $region21: #{generator_forward.1} parent=1 // pred_fallthru
      _
    // Predicated region
    $region22: #{generator_forward.1} parent=1 // pred_check
      _
    $region23: #{generator_forward.1} parent=1 // pred_check_branch
      %41 = sbr.rel (0) target = $region25
    $region24: #{generator_forward.1} parent=1 // pred_region
      _
    $region25: #{generator_forward.1} parent=1 // pred_fallthru
      _
    // Predicated region
    $region26: #{generator_forward.1} parent=1 // pred_check
      _
    $region27: #{generator_forward.1} parent=1 // pred_check_branch
      %43 = sbr.rel (0) target = $region29
    $region28: #{generator_forward.1} parent=1 // pred_region
      _
    $region29: #{generator_forward.1} parent=1 // pred_fallthru
      _
    // Predicated region
    $region30: #{generator_forward.1} parent=1 // pred_check
      _
    $region31: #{generator_forward.1} parent=1 // pred_check_branch
      %45 = sbr.rel (0) target = $region33
    $region32: #{generator_forward.1} parent=1 // pred_region
      %s47 = ssub.s32 4608, 4608
      %48 = vsyncadd [#allocation5], %s47
      %s49 = sshll.u32 [#allocation4], 4
      %s50 = int_to_ptr.vmem [resolvable:$true] %s49
      %55 = dma.hbm_to_vmem [thread:$0]  %s7, 4608, %s50, [#allocation5], 1152, 1152, 72
    $region33: #{generator_forward.1} parent=1 // pred_fallthru
      _
    // Predicated region
    $region34: #{generator_forward.1} parent=1 // pred_check
      _
    $region35: #{generator_forward.1} parent=1 // pred_check_branch
      %57 = sbr.rel (0) target = $region37
    $region36: #{generator_forward.1} parent=1 // pred_region
      _
    $region37: #{generator_forward.1} parent=1 // pred_fallthru
      _
    // Predicated region
    $region38: #{generator_forward.1} parent=1 // pred_check
      _
    $region39: #{generator_forward.1} parent=1 // pred_check_branch
      %59 = sbr.rel (0) target = $region41
    $region40: #{generator_forward.1} parent=1 // pred_region
      _
    $region41: #{generator_forward.1} parent=1 // pred_fallthru
      _
    // Predicated region
    $region42: #{generator_forward.1} parent=1 // pred_check
      _
    $region43: #{generator_forward.1} parent=1 // pred_check_branch
      %61 = sbr.rel (0) target = $region45
    $region44: #{generator_forward.1} parent=1 // pred_region
      %s63 = ssub.s32 8192, 8192
      %64 = vsyncadd [#allocation5], %s63
      %s65 = sshll.u32 [#allocation6], 4
      %s66 = int_to_ptr.vmem [resolvable:$true] %s65
      %71 = dma.hbm_to_vmem [thread:$0]  %s10, 8192, %s66, [#allocation5], 128, 128, 8
    $region45: #{generator_forward.1} parent=1 // pred_fallthru
      _
    // Predicated region
    $region46: #{generator_forward.1} parent=1 // pred_check
      _
    $region47: #{generator_forward.1} parent=1 // pred_check_branch
      %73 = sbr.rel (0) target = $region49
    $region48: #{generator_forward.1} parent=1 // pred_region
      %s75 = ssub.s32 5120, 5120
      %76 = vsyncadd [#allocation8], %s75
      %s77 = sshll.u32 [#allocation7], 4
      %s78 = int_to_ptr.vmem [resolvable:$true] %s77
      %83 = dma.hbm_to_vmem [thread:$0]  %s11, 5120, %s78, [#allocation8], 64, 64, 4
    $region49: #{generator_forward.1} parent=1 // pred_fallthru
      _
    // Predicated region
    $region50: #{generator_forward.1} parent=1 // pred_check
      _
    $region51: #{generator_forward.1} parent=1 // pred_check_branch
      %85 = sbr.rel (0) target = $region53
    $region52: #{generator_forward.1} parent=1 // pred_region
      %86 = dma.done [#allocation3], 32
    $region53: #{generator_forward.1} parent=1 // pred_fallthru
      _
    // Predicated region
    $region54: #{generator_forward.1} parent=1 // pred_check
      _
    $region55: #{generator_forward.1} parent=1 // pred_check_branch
      %88 = sbr.rel (0) target = $region57
    $region56: #{generator_forward.1} parent=1 // pred_region
      %89 = dma.done [#allocation5], 4608
    $region57: #{generator_forward.1} parent=1 // pred_fallthru
      _
    // Predicated region
    $region58: #{generator_forward.1} parent=1 // pred_check
      _
    $region59: #{generator_forward.1} parent=1 // pred_check_branch
      %91 = sbr.rel (0) target = $region61
    $region60: #{generator_forward.1} parent=1 // pred_region
      %92 = dma.done [#allocation5], 8192
    $region61: #{generator_forward.1} parent=1 // pred_fallthru
      _
    // Predicated region
    $region62: #{generator_forward.1} parent=1 // pred_check
      _
    $region63: #{generator_forward.1} parent=1 // pred_check_branch
      %94 = sbr.rel (0) target = $region65
    $region64: #{generator_forward.1} parent=1 // pred_region
      %95 = dma.done [#allocation8], 5120
    $region65: #{generator_forward.1} parent=1 // pred_fallthru
      _
    %v97 = vld [vmem:[#allocation2] sm:$0x3]
    %v98 = vld [vmem:[%s1] sm:$0xff]
    %v99 = vld [vmem:[%s1 + $0x8] sm:$0xff]
    %v100 = vld [vmem:[%s2] sm:$0x1]
    %v102 = vlaneseq
    %v103 = vshrl.u32 %v102, 7
    %v104 = vsub.s32 0, %v103
    %v105 = vrot.slane %v100, %v104
    %vm107 = vcmask 130048
    %v109 = vsel %vm107, %v97, 0
    %111 = vmatprep.subr.mxu0 0.0
    %112 = vmatpush1.msra.mxu0 %v98
    %113 = vmatprep.subr.mxu0 0.0
    %114 = vmatpush1.msra.mxu0 %v99
    %115 = vmatprep.subr.mxu0 0.0
    %116 = vmatpush1.msra.mxu0 0.0
    %117 = vmatprep.subr.mxu0 0.0
    %118 = vmatpush1.msra.mxu0 0.0
    %119 = vmatprep.subr.mxu0 0.0
    %120 = vmatpush1.msra.mxu0 0.0
    %121 = vmatprep.subr.mxu0 0.0
    %122 = vmatpush1.msra.mxu0 0.0
    %123 = vmatprep.subr.mxu0 0.0
    %124 = vmatpush1.msra.mxu0 0.0
    %125 = vmatprep.subr.mxu0 0.0
    %126 = vmatpush1.msra.mxu0 0.0
    %127 = vmatprep.subr.mxu0 0.0
    %128 = vmatpush1.msra.mxu0 0.0
    %129 = vmatprep.subr.mxu0 0.0
    %130 = vmatpush1.msra.mxu0 0.0
    %131 = vmatprep.subr.mxu0 0.0
    %132 = vmatpush1.msra.mxu0 0.0
    %133 = vmatprep.subr.mxu0 0.0
    %134 = vmatpush1.msra.mxu0 0.0
    %135 = vmatprep.subr.mxu0 0.0
    %136 = vmatpush1.msra.mxu0 0.0
    %137 = vmatprep.subr.mxu0 0.0
    %138 = vmatpush1.msra.mxu0 0.0
    %139 = vmatprep.subr.mxu0 0.0
    %140 = vmatpush1.msra.mxu0 0.0
    %141 = vmatprep.subr.mxu0 0.0
    %142 = vmatpush1.msra.mxu0 0.0
    %143 = vmatprep.subr.mxu0 0.0
    %144 = vmatpush1.msra.mxu0 0.0
    %145 = vmatprep.subr.mxu0 0.0
    %146 = vmatpush1.msra.mxu0 0.0
    %147 = vmatprep.subr.mxu0 0.0
    %148 = vmatpush1.msra.mxu0 0.0
    %149 = vmatprep.subr.mxu0 0.0
    %150 = vmatpush1.msra.mxu0 0.0
    %151 = vmatprep.subr.mxu0 0.0
    %152 = vmatpush1.msra.mxu0 0.0
    %153 = vmatprep.subr.mxu0 0.0
    %154 = vmatpush1.msra.mxu0 0.0
    %155 = vmatprep.subr.mxu0 0.0
    %156 = vmatpush1.msra.mxu0 0.0
    %157 = vmatprep.subr.mxu0 0.0
    %158 = vmatpush1.msra.mxu0 0.0
    %159 = vmatprep.subr.mxu0 0.0
    %160 = vmatpush1.msra.mxu0 0.0
    %161 = vmatprep.subr.mxu0 0.0
    %162 = vmatpush1.msra.mxu0 0.0
    %163 = vmatprep.subr.mxu0 0.0
    %164 = vmatpush1.msra.mxu0 0.0
    %165 = vmatprep.subr.mxu0 0.0
    %166 = vmatpush1.msra.mxu0 0.0
    %167 = vmatprep.subr.mxu0 0.0
    %168 = vmatpush1.msra.mxu0 0.0
    %169 = vmatprep.subr.mxu0 0.0
    %170 = vmatpush1.msra.mxu0 0.0
    %171 = vmatprep.subr.mxu0 0.0
    %172 = vmatpush1.msra.mxu0 0.0
    %173 = vmatprep.subr.mxu0 0.0
    %174 = vmatpush1.msra.mxu0 0.0
    %175 = vmatprep.mubr.f32.mxu0 0.0
    %176 = vmatmul.mubr.f32.gmra.mrb[0].mxu0 %v109
    %v177 = vpop.f32.mrb[0].mxu0
    %v178 = vadd.f32 %v105, %v177
    %v179 = vpop.f32.mrb[0].mxu0
    %180 = vdwg.mxu0
    %v181 = vtanh.pop %v178
    %v182 = vld [vmem:[%s3] sm:$0xff]
    %v183 = vld [vmem:[%s3 + $0x8] sm:$0xff]
    %v184 = vld [vmem:[%s3 + $0x10] sm:$0xff]
    %v185 = vld [vmem:[%s3 + $0x18] sm:$0xff]
    %v186 = vld [vmem:[%s4] sm:$0x1]
    %v188 = vlaneseq
    %v189 = vshrl.u32 %v188, 7
    %v190 = vsub.s32 0, %v189
    %v191 = vrot.slane %v186, %v190
    %vm193 = vcmask 261120
    %v195 = vsel %vm193, %v181, 0
    %197 = vmatprep.subr.mxu0 0.0
    %198 = vmatpush1.msra.mxu0 %v182
    %199 = vmatprep.subr.mxu0 0.0
    %200 = vmatpush1.msra.mxu0 %v183
    %201 = vmatprep.subr.mxu0 0.0
    %202 = vmatpush1.msra.mxu0 %v184
    %203 = vmatprep.subr.mxu0 0.0
    %204 = vmatpush1.msra.mxu0 %v185
    %205 = vmatprep.subr.mxu0 0.0
    %206 = vmatpush1.msra.mxu0 0.0
    %207 = vmatprep.subr.mxu0 0.0
    %208 = vmatpush1.msra.mxu0 0.0
    %209 = vmatprep.subr.mxu0 0.0
    %210 = vmatpush1.msra.mxu0 0.0
    %211 = vmatprep.subr.mxu0 0.0
    %212 = vmatpush1.msra.mxu0 0.0
    %213 = vmatprep.subr.mxu0 0.0
    %214 = vmatpush1.msra.mxu0 0.0
    %215 = vmatprep.subr.mxu0 0.0
    %216 = vmatpush1.msra.mxu0 0.0
    %217 = vmatprep.subr.mxu0 0.0
    %218 = vmatpush1.msra.mxu0 0.0
    %219 = vmatprep.subr.mxu0 0.0
    %220 = vmatpush1.msra.mxu0 0.0
    %221 = vmatprep.subr.mxu0 0.0
    %222 = vmatpush1.msra.mxu0 0.0
    %223 = vmatprep.subr.mxu0 0.0
    %224 = vmatpush1.msra.mxu0 0.0
    %225 = vmatprep.subr.mxu0 0.0
    %226 = vmatpush1.msra.mxu0 0.0
    %227 = vmatprep.subr.mxu0 0.0
    %228 = vmatpush1.msra.mxu0 0.0
    %229 = vmatprep.subr.mxu0 0.0
    %230 = vmatpush1.msra.mxu0 0.0
    %231 = vmatprep.subr.mxu0 0.0
    %232 = vmatpush1.msra.mxu0 0.0
    %233 = vmatprep.subr.mxu0 0.0
    %234 = vmatpush1.msra.mxu0 0.0
    %235 = vmatprep.subr.mxu0 0.0
    %236 = vmatpush1.msra.mxu0 0.0
    %237 = vmatprep.subr.mxu0 0.0
    %238 = vmatpush1.msra.mxu0 0.0
    %239 = vmatprep.subr.mxu0 0.0
    %240 = vmatpush1.msra.mxu0 0.0
    %241 = vmatprep.subr.mxu0 0.0
    %242 = vmatpush1.msra.mxu0 0.0
    %243 = vmatprep.subr.mxu0 0.0
    %244 = vmatpush1.msra.mxu0 0.0
    %245 = vmatprep.subr.mxu0 0.0
    %246 = vmatpush1.msra.mxu0 0.0
    %247 = vmatprep.subr.mxu0 0.0
    %248 = vmatpush1.msra.mxu0 0.0
    %249 = vmatprep.subr.mxu0 0.0
    %250 = vmatpush1.msra.mxu0 0.0
    %251 = vmatprep.subr.mxu0 0.0
    %252 = vmatpush1.msra.mxu0 0.0
    %253 = vmatprep.subr.mxu0 0.0
    %254 = vmatpush1.msra.mxu0 0.0
    %255 = vmatprep.subr.mxu0 0.0
    %256 = vmatpush1.msra.mxu0 0.0
    %257 = vmatprep.subr.mxu0 0.0
    %258 = vmatpush1.msra.mxu0 0.0
    %259 = vmatprep.subr.mxu0 0.0
    %260 = vmatpush1.msra.mxu0 0.0
    %261 = vmatprep.mubr.f32.mxu0 0.0
    %262 = vmatmul.mubr.f32.gmra.mrb[0].mxu0 %v195
    %v263 = vpop.f32.mrb[0].mxu0
    %v264 = vadd.f32 %v191, %v263
    %v265 = vpop.f32.mrb[0].mxu0
    %266 = vdwg.mxu0
    %v267 = vtanh.pop %v264
    %v268 = vld [vmem:[%s5] sm:$0xff]
    %v269 = vld [vmem:[%s5 + $0x8] sm:$0xff]
    %v270 = vld [vmem:[%s5 + $0x10] sm:$0xff]
    %v271 = vld [vmem:[%s5 + $0x18] sm:$0xff]
    %v272 = vld [vmem:[%s6] sm:$0x1]
    %v274 = vlaneseq
    %v275 = vshrl.u32 %v274, 7
    %v276 = vsub.s32 0, %v275
    %v277 = vrot.slane %v272, %v276
    %v280 = vsel %vm193, %v267, 0
    %282 = vmatprep.subr.mxu0 0.0
    %283 = vmatpush1.msra.mxu0 %v268
    %284 = vmatprep.subr.mxu0 0.0
    %285 = vmatpush1.msra.mxu0 %v269
    %286 = vmatprep.subr.mxu0 0.0
    %287 = vmatpush1.msra.mxu0 %v270
    %288 = vmatprep.subr.mxu0 0.0
    %289 = vmatpush1.msra.mxu0 %v271
    %290 = vmatprep.subr.mxu0 0.0
    %291 = vmatpush1.msra.mxu0 0.0
    %292 = vmatprep.subr.mxu0 0.0
    %293 = vmatpush1.msra.mxu0 0.0
    %294 = vmatprep.subr.mxu0 0.0
    %295 = vmatpush1.msra.mxu0 0.0
    %296 = vmatprep.subr.mxu0 0.0
    %297 = vmatpush1.msra.mxu0 0.0
    %298 = vmatprep.subr.mxu0 0.0
    %299 = vmatpush1.msra.mxu0 0.0
    %300 = vmatprep.subr.mxu0 0.0
    %301 = vmatpush1.msra.mxu0 0.0
    %302 = vmatprep.subr.mxu0 0.0
    %303 = vmatpush1.msra.mxu0 0.0
    %304 = vmatprep.subr.mxu0 0.0
    %305 = vmatpush1.msra.mxu0 0.0
    %306 = vmatprep.subr.mxu0 0.0
    %307 = vmatpush1.msra.mxu0 0.0
    %308 = vmatprep.subr.mxu0 0.0
    %309 = vmatpush1.msra.mxu0 0.0
    %310 = vmatprep.subr.mxu0 0.0
    %311 = vmatpush1.msra.mxu0 0.0
    %312 = vmatprep.subr.mxu0 0.0
    %313 = vmatpush1.msra.mxu0 0.0
    %314 = vmatprep.subr.mxu0 0.0
    %315 = vmatpush1.msra.mxu0 0.0
    %316 = vmatprep.subr.mxu0 0.0
    %317 = vmatpush1.msra.mxu0 0.0
    %318 = vmatprep.subr.mxu0 0.0
    %319 = vmatpush1.msra.mxu0 0.0
    %320 = vmatprep.subr.mxu0 0.0
    %321 = vmatpush1.msra.mxu0 0.0
    %322 = vmatprep.subr.mxu0 0.0
    %323 = vmatpush1.msra.mxu0 0.0
    %324 = vmatprep.subr.mxu0 0.0
    %325 = vmatpush1.msra.mxu0 0.0
    %326 = vmatprep.subr.mxu0 0.0
    %327 = vmatpush1.msra.mxu0 0.0
    %328 = vmatprep.subr.mxu0 0.0
    %329 = vmatpush1.msra.mxu0 0.0
    %330 = vmatprep.subr.mxu0 0.0
    %331 = vmatpush1.msra.mxu0 0.0
    %332 = vmatprep.subr.mxu0 0.0
    %333 = vmatpush1.msra.mxu0 0.0
    %334 = vmatprep.subr.mxu0 0.0
    %335 = vmatpush1.msra.mxu0 0.0
    %336 = vmatprep.subr.mxu0 0.0
    %337 = vmatpush1.msra.mxu0 0.0
    %338 = vmatprep.subr.mxu0 0.0
    %339 = vmatpush1.msra.mxu0 0.0
    %340 = vmatprep.subr.mxu0 0.0
    %341 = vmatpush1.msra.mxu0 0.0
    %342 = vmatprep.subr.mxu0 0.0
    %343 = vmatpush1.msra.mxu0 0.0
    %344 = vmatprep.subr.mxu0 0.0
    %345 = vmatpush1.msra.mxu0 0.0
    %346 = vmatprep.mubr.f32.mxu0 0.0
    %347 = vmatmul.mubr.f32.gmra.mrb[0].mxu0 %v280
    %v348 = vpop.f32.mrb[0].mxu0
    %v349 = vadd.f32 %v277, %v348
    %v350 = vpop.f32.mrb[0].mxu0
    %351 = vdwg.mxu0
    %v352 = vtanh.pop %v349
    %v353 = vld [vmem:[#allocation4] sm:$0xff]
    %v354 = vld [vmem:[#allocation4 + $0x8] sm:$0xff]
    %v355 = vld [vmem:[#allocation4 + $0x10] sm:$0xff]
    %v356 = vld [vmem:[#allocation4 + $0x18] sm:$0xff]
    %v357 = vld [vmem:[#allocation4 + $0x20] sm:$0xff]
    %v358 = vld [vmem:[#allocation4 + $0x28] sm:$0xff]
    %v359 = vld [vmem:[#allocation4 + $0x30] sm:$0xff]
    %v360 = vld [vmem:[#allocation4 + $0x38] sm:$0xff]
    %v361 = vld [vmem:[#allocation4 + $0x40] sm:$0xff]
    %v362 = vld [vmem:[#allocation4 + $0x48] sm:$0xff]
    %v363 = vld [vmem:[#allocation4 + $0x50] sm:$0xff]
    %v364 = vld [vmem:[#allocation4 + $0x58] sm:$0xff]
    %v365 = vld [vmem:[#allocation4 + $0x60] sm:$0xff]
    %v366 = vld [vmem:[#allocation4 + $0x68] sm:$0xff]
    %v367 = vld [vmem:[#allocation4 + $0x70] sm:$0xff]
    %v368 = vld [vmem:[#allocation4 + $0x78] sm:$0xff]
    %v369 = vld [vmem:[#allocation4 + $0x80] sm:$0xff]
    %v370 = vld [vmem:[#allocation4 + $0x88] sm:$0xff]
    %v371 = vld [vmem:[#allocation4 + $0x90] sm:$0xff]
    %v372 = vld [vmem:[#allocation4 + $0x98] sm:$0xff]
    %v373 = vld [vmem:[#allocation4 + $0xa0] sm:$0xff]
    %v374 = vld [vmem:[#allocation4 + $0xa8] sm:$0xff]
    %v375 = vld [vmem:[#allocation4 + $0xb0] sm:$0xff]
    %v376 = vld [vmem:[#allocation4 + $0xb8] sm:$0xff]
    %v377 = vld [vmem:[#allocation4 + $0xc0] sm:$0xff]
    %v378 = vld [vmem:[#allocation4 + $0xc8] sm:$0xff]
    %v379 = vld [vmem:[#allocation4 + $0xd0] sm:$0xff]
    %v380 = vld [vmem:[#allocation4 + $0xd8] sm:$0xff]
    %v381 = vld [vmem:[#allocation4 + $0xe0] sm:$0xff]
    %v382 = vld [vmem:[#allocation4 + $0xe8] sm:$0xff]
    %v383 = vld [vmem:[#allocation4 + $0xf0] sm:$0xff]
    %v384 = vld [vmem:[#allocation4 + $0xf8] sm:$0xff]
    %v385 = vld [vmem:[#allocation4 + $0x100] sm:$0xff]
    %v386 = vld [vmem:[#allocation4 + $0x108] sm:$0xff]
    %v387 = vld [vmem:[#allocation4 + $0x110] sm:$0xff]
    %v388 = vld [vmem:[#allocation4 + $0x118] sm:$0xff]
    %v389 = vld [vmem:[%s8] sm:$0xff]
    %v390 = vld [vmem:[%s8 + $0x8] sm:$0x1]
    %v393 = vlaneseq
    %v394 = vshrl.u32 %v393, 7
    %v395 = vsub.s32 0, %v394
    %v396 = vrot.slane %v389, %v395
    %v397 = vlaneseq
    %v398 = vshrl.u32 %v397, 7
    %v399 = vsub.s32 1, %v398
    %v400 = vrot.slane %v389, %v399
    %v401 = vlaneseq
    %v402 = vshrl.u32 %v401, 7
    %v403 = vsub.s32 2, %v402
    %v404 = vrot.slane %v389, %v403
    %v405 = vlaneseq
    %v406 = vshrl.u32 %v405, 7
    %v407 = vsub.s32 3, %v406
    %v408 = vrot.slane %v389, %v407
    %v409 = vlaneseq
    %v410 = vshrl.u32 %v409, 7
    %v411 = vsub.s32 4, %v410
    %v412 = vrot.slane %v389, %v411
    %v413 = vlaneseq
    %v414 = vshrl.u32 %v413, 7
    %v415 = vsub.s32 5, %v414
    %v416 = vrot.slane %v389, %v415
    %v417 = vlaneseq
    %v418 = vshrl.u32 %v417, 7
    %v419 = vsub.s32 6, %v418
    %v420 = vrot.slane %v389, %v419
    %v421 = vlaneseq
    %v422 = vshrl.u32 %v421, 7
    %v423 = vsub.s32 7, %v422
    %v424 = vrot.slane %v389, %v423
    %v425 = vlaneseq
    %v426 = vshrl.u32 %v425, 7
    %v427 = vsub.s32 0, %v426
    %v428 = vrot.slane %v390, %v427
    %v439 = vsel %vm193, %v352, 0
    %441 = vmatprep.subr.mxu0 %v354
    %442 = vmatpush1.msra.mxu0 %v353
    %443 = vmatprep.subr.mxu0 %v363
    %444 = vmatpush1.msra.mxu0 %v362
    %445 = vmatprep.subr.mxu0 %v372
    %446 = vmatpush1.msra.mxu0 %v371
    %447 = vmatprep.subr.mxu0 %v381
    %448 = vmatpush1.msra.mxu0 %v380
    %449 = vmatprep.subr.mxu0 0.0
    %450 = vmatpush1.msra.mxu0 0.0
    %451 = vmatprep.subr.mxu0 0.0
    %452 = vmatpush1.msra.mxu0 0.0
    %453 = vmatprep.subr.mxu0 0.0
    %454 = vmatpush1.msra.mxu0 0.0
    %455 = vmatprep.subr.mxu0 0.0
    %456 = vmatpush1.msra.mxu0 0.0
    %457 = vmatprep.subr.mxu0 0.0
    %458 = vmatpush1.msra.mxu0 0.0
    %459 = vmatprep.subr.mxu0 0.0
    %460 = vmatpush1.msra.mxu0 0.0
    %461 = vmatprep.subr.mxu0 0.0
    %462 = vmatpush1.msra.mxu0 0.0
    %463 = vmatprep.subr.mxu0 0.0
    %464 = vmatpush1.msra.mxu0 0.0
    %465 = vmatprep.subr.mxu0 0.0
    %466 = vmatpush1.msra.mxu0 0.0
    %467 = vmatprep.subr.mxu0 0.0
    %468 = vmatpush1.msra.mxu0 0.0
    %469 = vmatprep.subr.mxu0 0.0
    %470 = vmatpush1.msra.mxu0 0.0
    %471 = vmatprep.subr.mxu0 0.0
    %472 = vmatpush1.msra.mxu0 0.0
    %473 = vmatprep.subr.mxu0 0.0
    %474 = vmatpush1.msra.mxu0 0.0
    %475 = vmatprep.subr.mxu0 0.0
    %476 = vmatpush1.msra.mxu0 0.0
    %477 = vmatprep.subr.mxu0 0.0
    %478 = vmatpush1.msra.mxu0 0.0
    %479 = vmatprep.subr.mxu0 0.0
    %480 = vmatpush1.msra.mxu0 0.0
    %481 = vmatprep.subr.mxu0 0.0
    %482 = vmatpush1.msra.mxu0 0.0
    %483 = vmatprep.subr.mxu0 0.0
    %484 = vmatpush1.msra.mxu0 0.0
    %485 = vmatprep.subr.mxu0 0.0
    %486 = vmatpush1.msra.mxu0 0.0
    %487 = vmatprep.subr.mxu0 0.0
    %488 = vmatpush1.msra.mxu0 0.0
    %489 = vmatprep.subr.mxu0 0.0
    %490 = vmatpush1.msra.mxu0 0.0
    %491 = vmatprep.subr.mxu0 0.0
    %492 = vmatpush1.msra.mxu0 0.0
    %493 = vmatprep.subr.mxu0 0.0
    %494 = vmatpush1.msra.mxu0 0.0
    %495 = vmatprep.subr.mxu0 0.0
    %496 = vmatpush1.msra.mxu0 0.0
    %497 = vmatprep.subr.mxu0 0.0
    %498 = vmatpush1.msra.mxu0 0.0
    %499 = vmatprep.subr.mxu0 0.0
    %500 = vmatpush1.msra.mxu0 0.0
    %501 = vmatprep.subr.mxu0 0.0
    %502 = vmatpush1.msra.mxu0 0.0
    %503 = vmatprep.subr.mxu0 0.0
    %504 = vmatpush1.msra.mxu0 0.0
    %505 = vmatprep.mubr.f32.mxu0 0.0
    %506 = vmatmul.mubr.f32.gmra.mrb[0].mxu0 %v439
    %v507 = vpop.f32.mrb[0].mxu0
    %v508 = vadd.f32 %v396, %v507
    %v509 = vpop.f32.mrb[0].mxu0
    %v510 = vadd.f32 %v400, %v509
    %511 = vdwg.mxu0
    %512 = vmatprep.subr.mxu0 %v356
    %513 = vmatpush1.msra.mxu0 %v355
    %514 = vmatprep.subr.mxu0 %v365
    %515 = vmatpush1.msra.mxu0 %v364
    %516 = vmatprep.subr.mxu0 %v374
    %517 = vmatpush1.msra.mxu0 %v373
    %518 = vmatprep.subr.mxu0 %v383
    %519 = vmatpush1.msra.mxu0 %v382
    %520 = vmatprep.subr.mxu0 0.0
    %521 = vmatpush1.msra.mxu0 0.0
    %522 = vmatprep.subr.mxu0 0.0
    %523 = vmatpush1.msra.mxu0 0.0
    %524 = vmatprep.subr.mxu0 0.0
    %525 = vmatpush1.msra.mxu0 0.0
    %526 = vmatprep.subr.mxu0 0.0
    %527 = vmatpush1.msra.mxu0 0.0
    %528 = vmatprep.subr.mxu0 0.0
    %529 = vmatpush1.msra.mxu0 0.0
    %530 = vmatprep.subr.mxu0 0.0
    %531 = vmatpush1.msra.mxu0 0.0
    %532 = vmatprep.subr.mxu0 0.0
    %533 = vmatpush1.msra.mxu0 0.0
    %534 = vmatprep.subr.mxu0 0.0
    %535 = vmatpush1.msra.mxu0 0.0
    %536 = vmatprep.subr.mxu0 0.0
    %537 = vmatpush1.msra.mxu0 0.0
    %538 = vmatprep.subr.mxu0 0.0
    %539 = vmatpush1.msra.mxu0 0.0
    %540 = vmatprep.subr.mxu0 0.0
    %541 = vmatpush1.msra.mxu0 0.0
    %542 = vmatprep.subr.mxu0 0.0
    %543 = vmatpush1.msra.mxu0 0.0
    %544 = vmatprep.subr.mxu0 0.0
    %545 = vmatpush1.msra.mxu0 0.0
    %546 = vmatprep.subr.mxu0 0.0
    %547 = vmatpush1.msra.mxu0 0.0
    %548 = vmatprep.subr.mxu0 0.0
    %549 = vmatpush1.msra.mxu0 0.0
    %550 = vmatprep.subr.mxu0 0.0
    %551 = vmatpush1.msra.mxu0 0.0
    %552 = vmatprep.subr.mxu0 0.0
    %553 = vmatpush1.msra.mxu0 0.0
    %554 = vmatprep.subr.mxu0 0.0
    %555 = vmatpush1.msra.mxu0 0.0
    %556 = vmatprep.subr.mxu0 0.0
    %557 = vmatpush1.msra.mxu0 0.0
    %558 = vmatprep.subr.mxu0 0.0
    %559 = vmatpush1.msra.mxu0 0.0
    %560 = vmatprep.subr.mxu0 0.0
    %561 = vmatpush1.msra.mxu0 0.0
    %562 = vmatprep.subr.mxu0 0.0
    %563 = vmatpush1.msra.mxu0 0.0
    %564 = vmatprep.subr.mxu0 0.0
    %565 = vmatpush1.msra.mxu0 0.0
    %566 = vmatprep.subr.mxu0 0.0
    %567 = vmatpush1.msra.mxu0 0.0
    %568 = vmatprep.subr.mxu0 0.0
    %569 = vmatpush1.msra.mxu0 0.0
    %570 = vmatprep.subr.mxu0 0.0
    %571 = vmatpush1.msra.mxu0 0.0
    %572 = vmatprep.subr.mxu0 0.0
    %573 = vmatpush1.msra.mxu0 0.0
    %574 = vmatprep.subr.mxu0 0.0
    %575 = vmatpush1.msra.mxu0 0.0
    %576 = vmatprep.mubr.f32.mxu0 0.0
    %577 = vmatmul.mubr.f32.gmra.mrb[0].mxu0 %v439
    %v578 = vpop.f32.mrb[0].mxu0
    %v579 = vadd.f32 %v404, %v578
    %v580 = vpop.f32.mrb[0].mxu0
    %v581 = vadd.f32 %v408, %v580
    %582 = vdwg.mxu0
    %583 = vmatprep.subr.mxu0 %v358
    %584 = vmatpush1.msra.mxu0 %v357
    %585 = vmatprep.subr.mxu0 %v367
    %586 = vmatpush1.msra.mxu0 %v366
    %587 = vmatprep.subr.mxu0 %v376
    %588 = vmatpush1.msra.mxu0 %v375
    %589 = vmatprep.subr.mxu0 %v385
    %590 = vmatpush1.msra.mxu0 %v384
    %591 = vmatprep.subr.mxu0 0.0
    %592 = vmatpush1.msra.mxu0 0.0
    %593 = vmatprep.subr.mxu0 0.0
    %594 = vmatpush1.msra.mxu0 0.0
    %595 = vmatprep.subr.mxu0 0.0
    %596 = vmatpush1.msra.mxu0 0.0
    %597 = vmatprep.subr.mxu0 0.0
    %598 = vmatpush1.msra.mxu0 0.0
    %599 = vmatprep.subr.mxu0 0.0
    %600 = vmatpush1.msra.mxu0 0.0
    %601 = vmatprep.subr.mxu0 0.0
    %602 = vmatpush1.msra.mxu0 0.0
    %603 = vmatprep.subr.mxu0 0.0
    %604 = vmatpush1.msra.mxu0 0.0
    %605 = vmatprep.subr.mxu0 0.0
    %606 = vmatpush1.msra.mxu0 0.0
    %607 = vmatprep.subr.mxu0 0.0
    %608 = vmatpush1.msra.mxu0 0.0
    %609 = vmatprep.subr.mxu0 0.0
    %610 = vmatpush1.msra.mxu0 0.0
    %611 = vmatprep.subr.mxu0 0.0
    %612 = vmatpush1.msra.mxu0 0.0
    %613 = vmatprep.subr.mxu0 0.0
    %614 = vmatpush1.msra.mxu0 0.0
    %615 = vmatprep.subr.mxu0 0.0
    %616 = vmatpush1.msra.mxu0 0.0
    %617 = vmatprep.subr.mxu0 0.0
    %618 = vmatpush1.msra.mxu0 0.0
    %619 = vmatprep.subr.mxu0 0.0
    %620 = vmatpush1.msra.mxu0 0.0
    %621 = vmatprep.subr.mxu0 0.0
    %622 = vmatpush1.msra.mxu0 0.0
    %623 = vmatprep.subr.mxu0 0.0
    %624 = vmatpush1.msra.mxu0 0.0
    %625 = vmatprep.subr.mxu0 0.0
    %626 = vmatpush1.msra.mxu0 0.0
    %627 = vmatprep.subr.mxu0 0.0
    %628 = vmatpush1.msra.mxu0 0.0
    %629 = vmatprep.subr.mxu0 0.0
    %630 = vmatpush1.msra.mxu0 0.0
    %631 = vmatprep.subr.mxu0 0.0
    %632 = vmatpush1.msra.mxu0 0.0
    %633 = vmatprep.subr.mxu0 0.0
    %634 = vmatpush1.msra.mxu0 0.0
    %635 = vmatprep.subr.mxu0 0.0
    %636 = vmatpush1.msra.mxu0 0.0
    %637 = vmatprep.subr.mxu0 0.0
    %638 = vmatpush1.msra.mxu0 0.0
    %639 = vmatprep.subr.mxu0 0.0
    %640 = vmatpush1.msra.mxu0 0.0
    %641 = vmatprep.subr.mxu0 0.0
    %642 = vmatpush1.msra.mxu0 0.0
    %643 = vmatprep.subr.mxu0 0.0
    %644 = vmatpush1.msra.mxu0 0.0
    %645 = vmatprep.subr.mxu0 0.0
    %646 = vmatpush1.msra.mxu0 0.0
    %647 = vmatprep.mubr.f32.mxu0 0.0
    %648 = vmatmul.mubr.f32.gmra.mrb[0].mxu0 %v439
    %v649 = vpop.f32.mrb[0].mxu0
    %v650 = vadd.f32 %v412, %v649
    %v651 = vpop.f32.mrb[0].mxu0
    %v652 = vadd.f32 %v416, %v651
    %653 = vdwg.mxu0
    %654 = vmatprep.subr.mxu0 %v360
    %655 = vmatpush1.msra.mxu0 %v359
    %656 = vmatprep.subr.mxu0 %v369
    %657 = vmatpush1.msra.mxu0 %v368
    %658 = vmatprep.subr.mxu0 %v378
    %659 = vmatpush1.msra.mxu0 %v377
    %660 = vmatprep.subr.mxu0 %v387
    %661 = vmatpush1.msra.mxu0 %v386
    %662 = vmatprep.subr.mxu0 0.0
    %663 = vmatpush1.msra.mxu0 0.0
    %664 = vmatprep.subr.mxu0 0.0
    %665 = vmatpush1.msra.mxu0 0.0
    %666 = vmatprep.subr.mxu0 0.0
    %667 = vmatpush1.msra.mxu0 0.0
    %668 = vmatprep.subr.mxu0 0.0
    %669 = vmatpush1.msra.mxu0 0.0
    %670 = vmatprep.subr.mxu0 0.0
    %671 = vmatpush1.msra.mxu0 0.0
    %672 = vmatprep.subr.mxu0 0.0
    %673 = vmatpush1.msra.mxu0 0.0
    %674 = vmatprep.subr.mxu0 0.0
    %675 = vmatpush1.msra.mxu0 0.0
    %676 = vmatprep.subr.mxu0 0.0
    %677 = vmatpush1.msra.mxu0 0.0
    %678 = vmatprep.subr.mxu0 0.0
    %679 = vmatpush1.msra.mxu0 0.0
    %680 = vmatprep.subr.mxu0 0.0
    %681 = vmatpush1.msra.mxu0 0.0
    %682 = vmatprep.subr.mxu0 0.0
    %683 = vmatpush1.msra.mxu0 0.0
    %684 = vmatprep.subr.mxu0 0.0
    %685 = vmatpush1.msra.mxu0 0.0
    %686 = vmatprep.subr.mxu0 0.0
    %687 = vmatpush1.msra.mxu0 0.0
    %688 = vmatprep.subr.mxu0 0.0
    %689 = vmatpush1.msra.mxu0 0.0
    %690 = vmatprep.subr.mxu0 0.0
    %691 = vmatpush1.msra.mxu0 0.0
    %692 = vmatprep.subr.mxu0 0.0
    %693 = vmatpush1.msra.mxu0 0.0
    %694 = vmatprep.subr.mxu0 0.0
    %695 = vmatpush1.msra.mxu0 0.0
    %696 = vmatprep.subr.mxu0 0.0
    %697 = vmatpush1.msra.mxu0 0.0
    %698 = vmatprep.subr.mxu0 0.0
    %699 = vmatpush1.msra.mxu0 0.0
    %700 = vmatprep.subr.mxu0 0.0
    %701 = vmatpush1.msra.mxu0 0.0
    %702 = vmatprep.subr.mxu0 0.0
    %703 = vmatpush1.msra.mxu0 0.0
    %704 = vmatprep.subr.mxu0 0.0
    %705 = vmatpush1.msra.mxu0 0.0
    %706 = vmatprep.subr.mxu0 0.0
    %707 = vmatpush1.msra.mxu0 0.0
    %708 = vmatprep.subr.mxu0 0.0
    %709 = vmatpush1.msra.mxu0 0.0
    %710 = vmatprep.subr.mxu0 0.0
    %711 = vmatpush1.msra.mxu0 0.0
    %712 = vmatprep.subr.mxu0 0.0
    %713 = vmatpush1.msra.mxu0 0.0
    %714 = vmatprep.subr.mxu0 0.0
    %715 = vmatpush1.msra.mxu0 0.0
    %716 = vmatprep.subr.mxu0 0.0
    %717 = vmatpush1.msra.mxu0 0.0
    %718 = vmatprep.mubr.f32.mxu0 0.0
    %719 = vmatmul.mubr.f32.gmra.mrb[0].mxu0 %v439
    %v720 = vpop.f32.mrb[0].mxu0
    %v721 = vadd.f32 %v420, %v720
    %v722 = vpop.f32.mrb[0].mxu0
    %v723 = vadd.f32 %v424, %v722
    %724 = vdwg.mxu0
    %725 = vmatprep.subr.mxu0 0.0
    %726 = vmatpush1.msra.mxu0 %v361
    %727 = vmatprep.subr.mxu0 0.0
    %728 = vmatpush1.msra.mxu0 %v370
    %729 = vmatprep.subr.mxu0 0.0
    %730 = vmatpush1.msra.mxu0 %v379
    %731 = vmatprep.subr.mxu0 0.0
    %732 = vmatpush1.msra.mxu0 %v388
    %733 = vmatprep.subr.mxu0 0.0
    %734 = vmatpush1.msra.mxu0 0.0
    %735 = vmatprep.subr.mxu0 0.0
    %736 = vmatpush1.msra.mxu0 0.0
    %737 = vmatprep.subr.mxu0 0.0
    %738 = vmatpush1.msra.mxu0 0.0
    %739 = vmatprep.subr.mxu0 0.0
    %740 = vmatpush1.msra.mxu0 0.0
    %741 = vmatprep.subr.mxu0 0.0
    %742 = vmatpush1.msra.mxu0 0.0
    %743 = vmatprep.subr.mxu0 0.0
    %744 = vmatpush1.msra.mxu0 0.0
    %745 = vmatprep.subr.mxu0 0.0
    %746 = vmatpush1.msra.mxu0 0.0
    %747 = vmatprep.subr.mxu0 0.0
    %748 = vmatpush1.msra.mxu0 0.0
    %749 = vmatprep.subr.mxu0 0.0
    %750 = vmatpush1.msra.mxu0 0.0
    %751 = vmatprep.subr.mxu0 0.0
    %752 = vmatpush1.msra.mxu0 0.0
    %753 = vmatprep.subr.mxu0 0.0
    %754 = vmatpush1.msra.mxu0 0.0
    %755 = vmatprep.subr.mxu0 0.0
    %756 = vmatpush1.msra.mxu0 0.0
    %757 = vmatprep.subr.mxu0 0.0
    %758 = vmatpush1.msra.mxu0 0.0
    %759 = vmatprep.subr.mxu0 0.0
    %760 = vmatpush1.msra.mxu0 0.0
    %761 = vmatprep.subr.mxu0 0.0
    %762 = vmatpush1.msra.mxu0 0.0
    %763 = vmatprep.subr.mxu0 0.0
    %764 = vmatpush1.msra.mxu0 0.0
    %765 = vmatprep.subr.mxu0 0.0
    %766 = vmatpush1.msra.mxu0 0.0
    %767 = vmatprep.subr.mxu0 0.0
    %768 = vmatpush1.msra.mxu0 0.0
    %769 = vmatprep.subr.mxu0 0.0
    %770 = vmatpush1.msra.mxu0 0.0
    %771 = vmatprep.subr.mxu0 0.0
    %772 = vmatpush1.msra.mxu0 0.0
    %773 = vmatprep.subr.mxu0 0.0
    %774 = vmatpush1.msra.mxu0 0.0
    %775 = vmatprep.subr.mxu0 0.0
    %776 = vmatpush1.msra.mxu0 0.0
    %777 = vmatprep.subr.mxu0 0.0
    %778 = vmatpush1.msra.mxu0 0.0
    %779 = vmatprep.subr.mxu0 0.0
    %780 = vmatpush1.msra.mxu0 0.0
    %781 = vmatprep.subr.mxu0 0.0
    %782 = vmatpush1.msra.mxu0 0.0
    %783 = vmatprep.subr.mxu0 0.0
    %784 = vmatpush1.msra.mxu0 0.0
    %785 = vmatprep.subr.mxu0 0.0
    %786 = vmatpush1.msra.mxu0 0.0
    %787 = vmatprep.subr.mxu0 0.0
    %788 = vmatpush1.msra.mxu0 0.0
    %789 = vmatprep.mubr.f32.mxu0 0.0
    %790 = vmatmul.mubr.f32.gmra.mrb[0].mxu0 %v439
    %v791 = vpop.f32.mrb[0].mxu0
    %v792 = vadd.f32 %v428, %v791
    %v793 = vpop.f32.mrb[0].mxu0
    %794 = vdwg.mxu0
    %v795 = vld [vmem:[%s9] sm:$0xff]
    %v796 = vld [vmem:[%s9 + $0x8] sm:$0xff]
    %v797 = vld [vmem:[%s9 + $0x10] sm:$0x3]
    %v801 = vcombine.high %v795, %v795
    %v803 = vunpack.c.l.s4 1983009808
    %v804 = vunpack.c.0.s8 %v803
    %v805 = vlaneseq
    %v806 = vshrl.u32 %v805, 7
    %v807 = vsub.s32 %v804, %v806
    %v808 = vrot.slane %v795, %v807
    %v810 = vunpack.c.l.s4 1983009808
    %v811 = vunpack.c.0.s8 %v810
    %v812 = vlaneseq
    %v813 = vshrl.u32 %v812, 7
    %v814 = vsub.s32 %v811, %v813
    %v815 = vrot.slane %v801, %v814
    %v816 = vcombine.high %v808, %v808
    %v817 = vcombine.high %v815, %v815
    %v818 = vcombine.high %v796, %v796
    %v820 = vunpack.c.l.s4 1983009808
    %v821 = vunpack.c.0.s8 %v820
    %v822 = vlaneseq
    %v823 = vshrl.u32 %v822, 7
    %v824 = vsub.s32 %v821, %v823
    %v825 = vrot.slane %v796, %v824
    %v827 = vunpack.c.l.s4 1983009808
    %v828 = vunpack.c.0.s8 %v827
    %v829 = vlaneseq
    %v830 = vshrl.u32 %v829, 7
    %v831 = vsub.s32 %v828, %v830
    %v832 = vrot.slane %v818, %v831
    %v833 = vcombine.high %v825, %v825
    %v834 = vcombine.high %v832, %v832
    %v836 = vunpack.c.l.s4 1983009808
    %v837 = vunpack.c.0.s8 %v836
    %v838 = vlaneseq
    %v839 = vshrl.u32 %v838, 7
    %v840 = vsub.s32 %v837, %v839
    %v841 = vrot.slane %v797, %v840
    %v851 = vadd.f32 %v508, %v808
    %v852 = vadd.f32 %v510, %v816
    %v853 = vadd.f32 %v579, %v815
    %v854 = vadd.f32 %v581, %v817
    %v855 = vadd.f32 %v650, %v825
    %v856 = vadd.f32 %v652, %v833
    %v857 = vadd.f32 %v721, %v832
    %v858 = vadd.f32 %v723, %v834
    %v859 = vadd.f32 %v792, %v841
    %vm860 = vcmp.gt.f32.partialorder %v852, %v851
    %v861 = vsel %vm860, %v852, %v851
    %v862 = vsel %vm860, 1.0, 0.0
    %vm863 = vcmp.gt.f32.partialorder %v853, %v861
    %v864 = vsel %vm863, %v853, %v861
    %v865 = vsel %vm863, 2.0, %v862
    %vm866 = vcmp.gt.f32.partialorder %v854, %v864
    %v867 = vsel %vm866, 3.0, %v865
    %vm868 = vcmp.eq.f32.partialorder %v867, 0.0
    %v869 = vsel %vm868, 1, 0
    %v870 = vcvt.s32.f32 %v869
    %v871 = vpack.c.bf16 %v870, %v870
    %vm872 = vcmp.eq.f32.partialorder %v867, 1.0
    %v873 = vsel %vm872, 1, 0
    %v874 = vcvt.s32.f32 %v873
    %v875 = vpack.c.bf16 %v874, %v874
    %vm876 = vcmp.eq.f32.partialorder %v867, 2.0
    %v877 = vsel %vm876, 1, 0
    %v878 = vcvt.s32.f32 %v877
    %v879 = vpack.c.bf16 %v878, %v878
    %vm880 = vcmp.eq.f32.partialorder %v867, 3.0
    %v881 = vsel %vm880, 1, 0
    %v882 = vcvt.s32.f32 %v881
    %v883 = vpack.c.bf16 %v882, %v882
    %vm884 = vcmp.gt.f32.partialorder %v856, %v855
    %v885 = vsel %vm884, %v856, %v855
    %v886 = vsel %vm884, 1.0, 0.0
    %vm887 = vcmp.gt.f32.partialorder %v857, %v885
    %v888 = vsel %vm887, %v857, %v885
    %v889 = vsel %vm887, 2.0, %v886
    %vm890 = vcmp.gt.f32.partialorder %v858, %v888
    %v891 = vsel %vm890, %v858, %v888
    %v892 = vsel %vm890, 3.0, %v889
    %vm893 = vcmp.gt.f32.partialorder %v859, %v891
    %v894 = vsel %vm893, 4.0, %v892
    %vm895 = vcmp.eq.f32.partialorder %v894, 0.0
    %v896 = vsel %vm895, 1, 0
    %v897 = vcvt.s32.f32 %v896
    %v898 = vpack.c.bf16 %v897, %v897
    %vm899 = vcmp.eq.f32.partialorder %v894, 1.0
    %v900 = vsel %vm899, 1, 0
    %v901 = vcvt.s32.f32 %v900
    %v902 = vpack.c.bf16 %v901, %v901
    %vm903 = vcmp.eq.f32.partialorder %v894, 2.0
    %v904 = vsel %vm903, 1, 0
    %v905 = vcvt.s32.f32 %v904
    %v906 = vpack.c.bf16 %v905, %v905
    %vm907 = vcmp.eq.f32.partialorder %v894, 3.0
    %v908 = vsel %vm907, 1, 0
    %v909 = vcvt.s32.f32 %v908
    %v910 = vpack.c.bf16 %v909, %v909
    %vm911 = vcmp.eq.f32.partialorder %v894, 4.0
    %v912 = vsel %vm911, 1, 0
    %v913 = vcvt.s32.f32 %v912
    %v914 = vpack.c.bf16 %v913, %v913
    %v915 = vld [vmem:[#allocation6] sm:$0xff]
    %v916 = vld [vmem:[#allocation6 + $0x8] sm:$0xff]
    %v917 = vld [vmem:[#allocation6 + $0x10] sm:$0xff]
    %v918 = vld [vmem:[#allocation6 + $0x18] sm:$0xff]
    %v919 = vld [vmem:[#allocation6 + $0x20] sm:$0xff]
    %v920 = vld [vmem:[#allocation6 + $0x28] sm:$0xff]
    %v921 = vld [vmem:[#allocation6 + $0x30] sm:$0xff]
    %v922 = vld [vmem:[#allocation6 + $0x38] sm:$0xff]
    %v923 = vld [vmem:[#allocation6 + $0x40] sm:$0xff]
    %v924 = vld [vmem:[#allocation6 + $0x48] sm:$0xff]
    %v925 = vld [vmem:[#allocation6 + $0x50] sm:$0xff]
    %v926 = vld [vmem:[#allocation6 + $0x58] sm:$0xff]
    %v927 = vld [vmem:[#allocation6 + $0x60] sm:$0xff]
    %v928 = vld [vmem:[#allocation6 + $0x68] sm:$0xff]
    %v929 = vld [vmem:[#allocation6 + $0x70] sm:$0xff]
    %v930 = vld [vmem:[#allocation6 + $0x78] sm:$0xff]
    %v931 = vld [vmem:[#allocation6 + $0x80] sm:$0xff]
    %v932 = vld [vmem:[#allocation6 + $0x88] sm:$0xff]
    %v933 = vld [vmem:[#allocation6 + $0x90] sm:$0xff]
    %v934 = vld [vmem:[#allocation6 + $0x98] sm:$0xff]
    %v935 = vld [vmem:[#allocation6 + $0xa0] sm:$0xff]
    %v936 = vld [vmem:[#allocation6 + $0xa8] sm:$0xff]
    %v937 = vld [vmem:[#allocation6 + $0xb0] sm:$0xff]
    %v938 = vld [vmem:[#allocation6 + $0xb8] sm:$0xff]
    %v939 = vld [vmem:[#allocation6 + $0xc0] sm:$0xff]
    %v940 = vld [vmem:[#allocation6 + $0xc8] sm:$0xff]
    %v941 = vld [vmem:[#allocation6 + $0xd0] sm:$0xff]
    %v942 = vld [vmem:[#allocation6 + $0xd8] sm:$0xff]
    %v943 = vld [vmem:[#allocation6 + $0xe0] sm:$0xff]
    %v944 = vld [vmem:[#allocation6 + $0xe8] sm:$0xff]
    %v945 = vld [vmem:[#allocation6 + $0xf0] sm:$0xff]
    %v946 = vld [vmem:[#allocation6 + $0xf8] sm:$0xff]
    %v947 = vld [vmem:[#allocation6 + $0x100] sm:$0xff]
    %v948 = vld [vmem:[#allocation6 + $0x108] sm:$0xff]
    %v949 = vld [vmem:[#allocation6 + $0x110] sm:$0xff]
    %v950 = vld [vmem:[#allocation6 + $0x118] sm:$0xff]
    %v951 = vld [vmem:[#allocation6 + $0x120] sm:$0xff]
    %v952 = vld [vmem:[#allocation6 + $0x128] sm:$0xff]
    %v953 = vld [vmem:[#allocation6 + $0x130] sm:$0xff]
    %v954 = vld [vmem:[#allocation6 + $0x138] sm:$0xff]
    %v955 = vld [vmem:[#allocation6 + $0x140] sm:$0xff]
    %v956 = vld [vmem:[#allocation6 + $0x148] sm:$0xff]
    %v957 = vld [vmem:[#allocation6 + $0x150] sm:$0xff]
    %v958 = vld [vmem:[#allocation6 + $0x158] sm:$0xff]
    %v959 = vld [vmem:[#allocation6 + $0x160] sm:$0xff]
    %v960 = vld [vmem:[#allocation6 + $0x168] sm:$0xff]
    %v961 = vld [vmem:[#allocation6 + $0x170] sm:$0xff]
    %v962 = vld [vmem:[#allocation6 + $0x178] sm:$0xff]
    %v963 = vld [vmem:[#allocation6 + $0x180] sm:$0xff]
    %v964 = vld [vmem:[#allocation6 + $0x188] sm:$0xff]
    %v965 = vld [vmem:[#allocation6 + $0x190] sm:$0xff]
    %v966 = vld [vmem:[#allocation6 + $0x198] sm:$0xff]
    %v967 = vld [vmem:[#allocation6 + $0x1a0] sm:$0xff]
    %v968 = vld [vmem:[#allocation6 + $0x1a8] sm:$0xff]
    %v969 = vld [vmem:[#allocation6 + $0x1b0] sm:$0xff]
    %v970 = vld [vmem:[#allocation6 + $0x1b8] sm:$0xff]
    %v971 = vld [vmem:[#allocation6 + $0x1c0] sm:$0xff]
    %v972 = vld [vmem:[#allocation6 + $0x1c8] sm:$0xff]
    %v973 = vld [vmem:[#allocation6 + $0x1d0] sm:$0xff]
    %v974 = vld [vmem:[#allocation6 + $0x1d8] sm:$0xff]
    %v975 = vld [vmem:[#allocation6 + $0x1e0] sm:$0xff]
    %v976 = vld [vmem:[#allocation6 + $0x1e8] sm:$0xff]
    %v977 = vld [vmem:[#allocation6 + $0x1f0] sm:$0xff]
    %v978 = vld [vmem:[#allocation6 + $0x1f8] sm:$0xff]
    %v1043 = vunpack.c.l.b16 %v915
    %v1044 = vunpack.c.h.b16 %v915
    %v1045 = vunpack.c.l.b16 %v916
    %v1046 = vunpack.c.h.b16 %v916
    %v1047 = vunpack.c.l.b16 %v917
    %v1048 = vunpack.c.h.b16 %v917
    %v1049 = vunpack.c.l.b16 %v918
    %v1050 = vunpack.c.h.b16 %v918
    %v1051 = vunpack.c.l.b16 %v919
    %v1052 = vunpack.c.h.b16 %v919
    %v1053 = vunpack.c.l.b16 %v920
    %v1054 = vunpack.c.h.b16 %v920
    %v1055 = vunpack.c.l.b16 %v921
    %v1056 = vunpack.c.h.b16 %v921
    %v1057 = vunpack.c.l.b16 %v922
    %v1058 = vunpack.c.h.b16 %v922
    %v1059 = vunpack.c.l.b16 %v923
    %v1060 = vunpack.c.h.b16 %v923
    %v1061 = vunpack.c.l.b16 %v924
    %v1062 = vunpack.c.h.b16 %v924
    %v1063 = vunpack.c.l.b16 %v925
    %v1064 = vunpack.c.h.b16 %v925
    %v1065 = vunpack.c.l.b16 %v926
    %v1066 = vunpack.c.h.b16 %v926
    %v1067 = vunpack.c.l.b16 %v927
    %v1068 = vunpack.c.h.b16 %v927
    %v1069 = vunpack.c.l.b16 %v928
    %v1070 = vunpack.c.h.b16 %v928
    %v1071 = vunpack.c.l.b16 %v929
    %v1072 = vunpack.c.h.b16 %v929
    %v1073 = vunpack.c.l.b16 %v930
    %v1074 = vunpack.c.h.b16 %v930
    %v1075 = vunpack.c.l.b16 %v931
    %v1076 = vunpack.c.h.b16 %v931
    %v1077 = vunpack.c.l.b16 %v932
    %v1078 = vunpack.c.h.b16 %v932
    %v1079 = vunpack.c.l.b16 %v933
    %v1080 = vunpack.c.h.b16 %v933
    %v1081 = vunpack.c.l.b16 %v934
    %v1082 = vunpack.c.h.b16 %v934
    %v1083 = vunpack.c.l.b16 %v935
    %v1084 = vunpack.c.h.b16 %v935
    %v1085 = vunpack.c.l.b16 %v936
    %v1086 = vunpack.c.h.b16 %v936
    %v1087 = vunpack.c.l.b16 %v937
    %v1088 = vunpack.c.h.b16 %v937
    %v1089 = vunpack.c.l.b16 %v938
    %v1090 = vunpack.c.h.b16 %v938
    %v1091 = vunpack.c.l.b16 %v939
    %v1092 = vunpack.c.h.b16 %v939
    %v1093 = vunpack.c.l.b16 %v940
    %v1094 = vunpack.c.h.b16 %v940
    %v1095 = vunpack.c.l.b16 %v941
    %v1096 = vunpack.c.h.b16 %v941
    %v1097 = vunpack.c.l.b16 %v942
    %v1098 = vunpack.c.h.b16 %v942
    %v1099 = vunpack.c.l.b16 %v943
    %v1100 = vunpack.c.h.b16 %v943
    %v1101 = vunpack.c.l.b16 %v944
    %v1102 = vunpack.c.h.b16 %v944
    %v1103 = vunpack.c.l.b16 %v945
    %v1104 = vunpack.c.h.b16 %v945
    %v1105 = vunpack.c.l.b16 %v946
    %v1106 = vunpack.c.h.b16 %v946
    %v1107 = vunpack.c.l.b16 %v947
    %v1108 = vunpack.c.h.b16 %v947
    %v1109 = vunpack.c.l.b16 %v948
    %v1110 = vunpack.c.h.b16 %v948
    %v1111 = vunpack.c.l.b16 %v949
    %v1112 = vunpack.c.h.b16 %v949
    %v1113 = vunpack.c.l.b16 %v950
    %v1114 = vunpack.c.h.b16 %v950
    %v1115 = vunpack.c.l.b16 %v951
    %v1116 = vunpack.c.h.b16 %v951
    %v1117 = vunpack.c.l.b16 %v952
    %v1118 = vunpack.c.h.b16 %v952
    %v1119 = vunpack.c.l.b16 %v953
    %v1120 = vunpack.c.h.b16 %v953
    %v1121 = vunpack.c.l.b16 %v954
    %v1122 = vunpack.c.h.b16 %v954
    %v1123 = vunpack.c.l.b16 %v955
    %v1124 = vunpack.c.h.b16 %v955
    %v1125 = vunpack.c.l.b16 %v956
    %v1126 = vunpack.c.h.b16 %v956
    %v1127 = vunpack.c.l.b16 %v957
    %v1128 = vunpack.c.h.b16 %v957
    %v1129 = vunpack.c.l.b16 %v958
    %v1130 = vunpack.c.h.b16 %v958
    %v1131 = vunpack.c.l.b16 %v959
    %v1132 = vunpack.c.h.b16 %v959
    %v1133 = vunpack.c.l.b16 %v960
    %v1134 = vunpack.c.h.b16 %v960
    %v1135 = vunpack.c.l.b16 %v961
    %v1136 = vunpack.c.h.b16 %v961
    %v1137 = vunpack.c.l.b16 %v962
    %v1138 = vunpack.c.h.b16 %v962
    %v1139 = vunpack.c.l.b16 %v963
    %v1140 = vunpack.c.h.b16 %v963
    %v1141 = vunpack.c.l.b16 %v964
    %v1142 = vunpack.c.h.b16 %v964
    %v1143 = vunpack.c.l.b16 %v965
    %v1144 = vunpack.c.h.b16 %v965
    %v1145 = vunpack.c.l.b16 %v966
    %v1146 = vunpack.c.h.b16 %v966
    %v1147 = vunpack.c.l.b16 %v967
    %v1148 = vunpack.c.h.b16 %v967
    %v1149 = vunpack.c.l.b16 %v968
    %v1150 = vunpack.c.h.b16 %v968
    %v1151 = vunpack.c.l.b16 %v969
    %v1152 = vunpack.c.h.b16 %v969
    %v1153 = vunpack.c.l.b16 %v970
    %v1154 = vunpack.c.h.b16 %v970
    %v1155 = vunpack.c.l.b16 %v971
    %v1156 = vunpack.c.h.b16 %v971
    %v1157 = vunpack.c.l.b16 %v972
    %v1158 = vunpack.c.h.b16 %v972
    %v1159 = vunpack.c.l.b16 %v973
    %v1160 = vunpack.c.h.b16 %v973
    %v1161 = vunpack.c.l.b16 %v974
    %v1162 = vunpack.c.h.b16 %v974
    %v1163 = vunpack.c.l.b16 %v975
    %v1164 = vunpack.c.h.b16 %v975
    %v1165 = vunpack.c.l.b16 %v976
    %v1166 = vunpack.c.h.b16 %v976
    %v1167 = vunpack.c.l.b16 %v977
    %v1168 = vunpack.c.h.b16 %v977
    %v1169 = vunpack.c.l.b16 %v978
    %v1170 = vunpack.c.h.b16 %v978
    %v1171 = vpack.c.b16 %v1045, %v1043
    %v1172 = vpack.c.b16 %v1046, %v1044
    %v1173 = vpack.c.b16 %v1049, %v1047
    %v1174 = vpack.c.b16 %v1050, %v1048
    %v1175 = vpack.c.b16 %v1053, %v1051
    %v1176 = vpack.c.b16 %v1054, %v1052
    %v1177 = vpack.c.b16 %v1057, %v1055
    %v1178 = vpack.c.b16 %v1058, %v1056
    %v1179 = vpack.c.b16 %v1061, %v1059
    %v1180 = vpack.c.b16 %v1062, %v1060
    %v1181 = vpack.c.b16 %v1065, %v1063
    %v1182 = vpack.c.b16 %v1066, %v1064
    %v1183 = vpack.c.b16 %v1069, %v1067
    %v1184 = vpack.c.b16 %v1070, %v1068
    %v1185 = vpack.c.b16 %v1073, %v1071
    %v1186 = vpack.c.b16 %v1074, %v1072
    %v1187 = vpack.c.b16 %v1077, %v1075
    %v1188 = vpack.c.b16 %v1078, %v1076
    %v1189 = vpack.c.b16 %v1081, %v1079
    %v1190 = vpack.c.b16 %v1082, %v1080
    %v1191 = vpack.c.b16 %v1085, %v1083
    %v1192 = vpack.c.b16 %v1086, %v1084
    %v1193 = vpack.c.b16 %v1089, %v1087
    %v1194 = vpack.c.b16 %v1090, %v1088
    %v1195 = vpack.c.b16 %v1093, %v1091
    %v1196 = vpack.c.b16 %v1094, %v1092
    %v1197 = vpack.c.b16 %v1097, %v1095
    %v1198 = vpack.c.b16 %v1098, %v1096
    %v1199 = vpack.c.b16 %v1101, %v1099
    %v1200 = vpack.c.b16 %v1102, %v1100
    %v1201 = vpack.c.b16 %v1105, %v1103
    %v1202 = vpack.c.b16 %v1106, %v1104
    %v1203 = vpack.c.b16 %v1109, %v1107
    %v1204 = vpack.c.b16 %v1110, %v1108
    %v1205 = vpack.c.b16 %v1113, %v1111
    %v1206 = vpack.c.b16 %v1114, %v1112
    %v1207 = vpack.c.b16 %v1117, %v1115
    %v1208 = vpack.c.b16 %v1118, %v1116
    %v1209 = vpack.c.b16 %v1121, %v1119
    %v1210 = vpack.c.b16 %v1122, %v1120
    %v1211 = vpack.c.b16 %v1125, %v1123
    %v1212 = vpack.c.b16 %v1126, %v1124
    %v1213 = vpack.c.b16 %v1129, %v1127
    %v1214 = vpack.c.b16 %v1130, %v1128
    %v1215 = vpack.c.b16 %v1133, %v1131
    %v1216 = vpack.c.b16 %v1134, %v1132
    %v1217 = vpack.c.b16 %v1137, %v1135
    %v1218 = vpack.c.b16 %v1138, %v1136
    %v1219 = vpack.c.b16 %v1141, %v1139
    %v1220 = vpack.c.b16 %v1142, %v1140
    %v1221 = vpack.c.b16 %v1145, %v1143
    %v1222 = vpack.c.b16 %v1146, %v1144
    %v1223 = vpack.c.b16 %v1149, %v1147
    %v1224 = vpack.c.b16 %v1150, %v1148
    %v1225 = vpack.c.b16 %v1153, %v1151
    %v1226 = vpack.c.b16 %v1154, %v1152
    %v1227 = vpack.c.b16 %v1157, %v1155
    %v1228 = vpack.c.b16 %v1158, %v1156
    %v1229 = vpack.c.b16 %v1161, %v1159
    %v1230 = vpack.c.b16 %v1162, %v1160
    %v1231 = vpack.c.b16 %v1165, %v1163
    %v1232 = vpack.c.b16 %v1166, %v1164
    %v1233 = vpack.c.b16 %v1169, %v1167
    %v1234 = vpack.c.b16 %v1170, %v1168
    %1299 = vmatprep.subr.bf16.mxu0 %v1172
    %1300 = vmatpush1.bf16.msra.mxu0 %v1171
    %1301 = vmatprep.subr.bf16.mxu0 %v1174
    %1302 = vmatpush1.bf16.msra.mxu0 %v1173
    %1303 = vmatprep.subr.bf16.mxu0 %v1176
    %1304 = vmatpush1.bf16.msra.mxu0 %v1175
    %1305 = vmatprep.subr.bf16.mxu0 %v1178
    %1306 = vmatpush1.bf16.msra.mxu0 %v1177
    %1307 = vmatprep.subr.bf16.mxu0 %v1180
    %1308 = vmatpush1.bf16.msra.mxu0 %v1179
    %1309 = vmatprep.subr.bf16.mxu0 %v1182
    %1310 = vmatpush1.bf16.msra.mxu0 %v1181
    %1311 = vmatprep.subr.bf16.mxu0 %v1184
    %1312 = vmatpush1.bf16.msra.mxu0 %v1183
    %1313 = vmatprep.subr.bf16.mxu0 %v1186
    %1314 = vmatpush1.bf16.msra.mxu0 %v1185
    %1315 = vmatprep.subr.bf16.mxu0 %v1188
    %1316 = vmatpush1.bf16.msra.mxu0 %v1187
    %1317 = vmatprep.subr.bf16.mxu0 %v1190
    %1318 = vmatpush1.bf16.msra.mxu0 %v1189
    %1319 = vmatprep.subr.bf16.mxu0 %v1192
    %1320 = vmatpush1.bf16.msra.mxu0 %v1191
    %1321 = vmatprep.subr.bf16.mxu0 %v1194
    %1322 = vmatpush1.bf16.msra.mxu0 %v1193
    %1323 = vmatprep.subr.bf16.mxu0 %v1196
    %1324 = vmatpush1.bf16.msra.mxu0 %v1195
    %1325 = vmatprep.subr.bf16.mxu0 %v1198
    %1326 = vmatpush1.bf16.msra.mxu0 %v1197
    %1327 = vmatprep.subr.bf16.mxu0 %v1200
    %1328 = vmatpush1.bf16.msra.mxu0 %v1199
    %1329 = vmatprep.subr.bf16.mxu0 %v1202
    %1330 = vmatpush1.bf16.msra.mxu0 %v1201
    %1331 = vmatprep.mubr.bf16.mxu0 %v875
    %1332 = vmatmul.mubr.bf16.gmra.mrb[0].mxu0 %v871
    %v1333 = vpop.f32.mrb[0].mxu0
    %v1334 = vadd.f32 0.0, %v1333
    %v1335 = vpop.f32.mrb[0].mxu0
    %v1336 = vadd.f32 0.0, %v1335
    %v1337 = vpop.f32.mrb[0].mxu0
    %v1338 = vpop.f32.mrb[0].mxu0
    %1339 = vdwg.mxu0
    %1340 = vmatprep.subr.bf16.mxu0 %v1204
    %1341 = vmatpush1.bf16.msra.mxu0 %v1203
    %1342 = vmatprep.subr.bf16.mxu0 %v1206
    %1343 = vmatpush1.bf16.msra.mxu0 %v1205
    %1344 = vmatprep.subr.bf16.mxu0 %v1208
    %1345 = vmatpush1.bf16.msra.mxu0 %v1207
    %1346 = vmatprep.subr.bf16.mxu0 %v1210
    %1347 = vmatpush1.bf16.msra.mxu0 %v1209
    %1348 = vmatprep.subr.bf16.mxu0 %v1212
    %1349 = vmatpush1.bf16.msra.mxu0 %v1211
    %1350 = vmatprep.subr.bf16.mxu0 %v1214
    %1351 = vmatpush1.bf16.msra.mxu0 %v1213
    %1352 = vmatprep.subr.bf16.mxu0 %v1216
    %1353 = vmatpush1.bf16.msra.mxu0 %v1215
    %1354 = vmatprep.subr.bf16.mxu0 %v1218
    %1355 = vmatpush1.bf16.msra.mxu0 %v1217
    %1356 = vmatprep.subr.bf16.mxu0 %v1220
    %1357 = vmatpush1.bf16.msra.mxu0 %v1219
    %1358 = vmatprep.subr.bf16.mxu0 %v1222
    %1359 = vmatpush1.bf16.msra.mxu0 %v1221
    %1360 = vmatprep.subr.bf16.mxu0 %v1224
    %1361 = vmatpush1.bf16.msra.mxu0 %v1223
    %1362 = vmatprep.subr.bf16.mxu0 %v1226
    %1363 = vmatpush1.bf16.msra.mxu0 %v1225
    %1364 = vmatprep.subr.bf16.mxu0 %v1228
    %1365 = vmatpush1.bf16.msra.mxu0 %v1227
    %1366 = vmatprep.subr.bf16.mxu0 %v1230
    %1367 = vmatpush1.bf16.msra.mxu0 %v1229
    %1368 = vmatprep.subr.bf16.mxu0 %v1232
    %1369 = vmatpush1.bf16.msra.mxu0 %v1231
    %1370 = vmatprep.subr.bf16.mxu0 %v1234
    %1371 = vmatpush1.bf16.msra.mxu0 %v1233
    %1372 = vmatprep.mubr.bf16.mxu0 %v883
    %1373 = vmatmul.mubr.bf16.gmra.mrb[0].mxu0 %v879
    %v1374 = vpop.f32.mrb[0].mxu0
    %v1375 = vadd.f32 %v1334, %v1374
    %v1376 = vpop.f32.mrb[0].mxu0
    %v1377 = vadd.f32 %v1336, %v1376
    %v1378 = vpop.f32.mrb[0].mxu0
    %v1379 = vpop.f32.mrb[0].mxu0
    %1380 = vdwg.mxu0
    %v1383 = vcombine.low %v1375, %v1377
    %v1385 = vunpack.c.l.s4 1983009808
    %v1386 = vunpack.c.0.s8 %v1385
    %v1387 = vlaneseq
    %v1388 = vshrl.u32 %v1387, 7
    %v1389 = vsub.s32 %v1386, %v1388
    %v1390 = vrot.slane %v1383, %v1389
    %1392 = vst [vmem:[%s13] sm:$0xf] %v1390
    %v1393 = vld [vmem:[#allocation7] sm:$0xf]
    %v1394 = vld [vmem:[#allocation7 + $0x4] sm:$0xf]
    %v1395 = vld [vmem:[#allocation7 + $0x8] sm:$0xf]
    %v1396 = vld [vmem:[#allocation7 + $0xc] sm:$0xf]
    %v1397 = vld [vmem:[#allocation7 + $0x10] sm:$0xf]
    %v1398 = vld [vmem:[#allocation7 + $0x14] sm:$0xf]
    %v1399 = vld [vmem:[#allocation7 + $0x18] sm:$0xf]
    %v1400 = vld [vmem:[#allocation7 + $0x1c] sm:$0xf]
    %v1401 = vld [vmem:[#allocation7 + $0x20] sm:$0xf]
    %v1402 = vld [vmem:[#allocation7 + $0x24] sm:$0xf]
    %v1403 = vld [vmem:[#allocation7 + $0x28] sm:$0xf]
    %v1404 = vld [vmem:[#allocation7 + $0x2c] sm:$0xf]
    %v1405 = vld [vmem:[#allocation7 + $0x30] sm:$0xf]
    %v1406 = vld [vmem:[#allocation7 + $0x34] sm:$0xf]
    %v1407 = vld [vmem:[#allocation7 + $0x38] sm:$0xf]
    %v1408 = vld [vmem:[#allocation7 + $0x3c] sm:$0xf]
    %v1409 = vld [vmem:[#allocation7 + $0x40] sm:$0xf]
    %v1410 = vld [vmem:[#allocation7 + $0x44] sm:$0xf]
    %v1411 = vld [vmem:[#allocation7 + $0x48] sm:$0xf]
    %v1412 = vld [vmem:[#allocation7 + $0x4c] sm:$0xf]
    %v1413 = vld [vmem:[#allocation7 + $0x50] sm:$0xf]
    %v1414 = vld [vmem:[#allocation7 + $0x54] sm:$0xf]
    %v1415 = vld [vmem:[#allocation7 + $0x58] sm:$0xf]
    %v1416 = vld [vmem:[#allocation7 + $0x5c] sm:$0xf]
    %v1417 = vld [vmem:[#allocation7 + $0x60] sm:$0xf]
    %v1418 = vld [vmem:[#allocation7 + $0x64] sm:$0xf]
    %v1419 = vld [vmem:[#allocation7 + $0x68] sm:$0xf]
    %v1420 = vld [vmem:[#allocation7 + $0x6c] sm:$0xf]
    %v1421 = vld [vmem:[#allocation7 + $0x70] sm:$0xf]
    %v1422 = vld [vmem:[#allocation7 + $0x74] sm:$0xf]
    %v1423 = vld [vmem:[#allocation7 + $0x78] sm:$0xf]
    %v1424 = vld [vmem:[#allocation7 + $0x7c] sm:$0xf]
    %v1425 = vld [vmem:[#allocation7 + $0x80] sm:$0xf]
    %v1426 = vld [vmem:[#allocation7 + $0x84] sm:$0xf]
    %v1427 = vld [vmem:[#allocation7 + $0x88] sm:$0xf]
    %v1428 = vld [vmem:[#allocation7 + $0x8c] sm:$0xf]
    %v1429 = vld [vmem:[#allocation7 + $0x90] sm:$0xf]
    %v1430 = vld [vmem:[#allocation7 + $0x94] sm:$0xf]
    %v1431 = vld [vmem:[#allocation7 + $0x98] sm:$0xf]
    %v1432 = vld [vmem:[#allocation7 + $0x9c] sm:$0xf]
    %v1433 = vld [vmem:[#allocation7 + $0xa0] sm:$0xf]
    %v1434 = vld [vmem:[#allocation7 + $0xa4] sm:$0xf]
    %v1435 = vld [vmem:[#allocation7 + $0xa8] sm:$0xf]
    %v1436 = vld [vmem:[#allocation7 + $0xac] sm:$0xf]
    %v1437 = vld [vmem:[#allocation7 + $0xb0] sm:$0xf]
    %v1438 = vld [vmem:[#allocation7 + $0xb4] sm:$0xf]
    %v1439 = vld [vmem:[#allocation7 + $0xb8] sm:$0xf]
    %v1440 = vld [vmem:[#allocation7 + $0xbc] sm:$0xf]
    %v1441 = vld [vmem:[#allocation7 + $0xc0] sm:$0xf]
    %v1442 = vld [vmem:[#allocation7 + $0xc4] sm:$0xf]
    %v1443 = vld [vmem:[#allocation7 + $0xc8] sm:$0xf]
    %v1444 = vld [vmem:[#allocation7 + $0xcc] sm:$0xf]
    %v1445 = vld [vmem:[#allocation7 + $0xd0] sm:$0xf]
    %v1446 = vld [vmem:[#allocation7 + $0xd4] sm:$0xf]
    %v1447 = vld [vmem:[#allocation7 + $0xd8] sm:$0xf]
    %v1448 = vld [vmem:[#allocation7 + $0xdc] sm:$0xf]
    %v1449 = vld [vmem:[#allocation7 + $0xe0] sm:$0xf]
    %v1450 = vld [vmem:[#allocation7 + $0xe4] sm:$0xf]
    %v1451 = vld [vmem:[#allocation7 + $0xe8] sm:$0xf]
    %v1452 = vld [vmem:[#allocation7 + $0xec] sm:$0xf]
    %v1453 = vld [vmem:[#allocation7 + $0xf0] sm:$0xf]
    %v1454 = vld [vmem:[#allocation7 + $0xf4] sm:$0xf]
    %v1455 = vld [vmem:[#allocation7 + $0xf8] sm:$0xf]
    %v1456 = vld [vmem:[#allocation7 + $0xfc] sm:$0xf]
    %v1457 = vld [vmem:[#allocation7 + $0x100] sm:$0xf]
    %v1458 = vld [vmem:[#allocation7 + $0x104] sm:$0xf]
    %v1459 = vld [vmem:[#allocation7 + $0x108] sm:$0xf]
    %v1460 = vld [vmem:[#allocation7 + $0x10c] sm:$0xf]
    %v1461 = vld [vmem:[#allocation7 + $0x110] sm:$0xf]
    %v1462 = vld [vmem:[#allocation7 + $0x114] sm:$0xf]
    %v1463 = vld [vmem:[#allocation7 + $0x118] sm:$0xf]
    %v1464 = vld [vmem:[#allocation7 + $0x11c] sm:$0xf]
    %v1465 = vld [vmem:[#allocation7 + $0x120] sm:$0xf]
    %v1466 = vld [vmem:[#allocation7 + $0x124] sm:$0xf]
    %v1467 = vld [vmem:[#allocation7 + $0x128] sm:$0xf]
    %v1468 = vld [vmem:[#allocation7 + $0x12c] sm:$0xf]
    %v1469 = vld [vmem:[#allocation7 + $0x130] sm:$0xf]
    %v1470 = vld [vmem:[#allocation7 + $0x134] sm:$0xf]
    %v1471 = vld [vmem:[#allocation7 + $0x138] sm:$0xf]
    %v1472 = vld [vmem:[#allocation7 + $0x13c] sm:$0xf]
    %v1553 = vunpack.c.l.b16 %v1393
    %v1554 = vunpack.c.l.b16 %v1394
    %v1555 = vunpack.c.l.b16 %v1395
    %v1556 = vunpack.c.l.b16 %v1396
    %v1557 = vunpack.c.l.b16 %v1397
    %v1558 = vunpack.c.l.b16 %v1398
    %v1559 = vunpack.c.l.b16 %v1399
    %v1560 = vunpack.c.l.b16 %v1400
    %v1561 = vunpack.c.l.b16 %v1401
    %v1562 = vunpack.c.l.b16 %v1402
    %v1563 = vunpack.c.l.b16 %v1403
    %v1564 = vunpack.c.l.b16 %v1404
    %v1565 = vunpack.c.l.b16 %v1405
    %v1566 = vunpack.c.l.b16 %v1406
    %v1567 = vunpack.c.l.b16 %v1407
    %v1568 = vunpack.c.l.b16 %v1408
    %v1569 = vunpack.c.l.b16 %v1409
    %v1570 = vunpack.c.l.b16 %v1410
    %v1571 = vunpack.c.l.b16 %v1411
    %v1572 = vunpack.c.l.b16 %v1412
    %v1573 = vunpack.c.l.b16 %v1413
    %v1574 = vunpack.c.l.b16 %v1414
    %v1575 = vunpack.c.l.b16 %v1415
    %v1576 = vunpack.c.l.b16 %v1416
    %v1577 = vunpack.c.l.b16 %v1417
    %v1578 = vunpack.c.l.b16 %v1418
    %v1579 = vunpack.c.l.b16 %v1419
    %v1580 = vunpack.c.l.b16 %v1420
    %v1581 = vunpack.c.l.b16 %v1421
    %v1582 = vunpack.c.l.b16 %v1422
    %v1583 = vunpack.c.l.b16 %v1423
    %v1584 = vunpack.c.l.b16 %v1424
    %v1585 = vunpack.c.l.b16 %v1425
    %v1586 = vunpack.c.l.b16 %v1426
    %v1587 = vunpack.c.l.b16 %v1427
    %v1588 = vunpack.c.l.b16 %v1428
    %v1589 = vunpack.c.l.b16 %v1429
    %v1590 = vunpack.c.l.b16 %v1430
    %v1591 = vunpack.c.l.b16 %v1431
    %v1592 = vunpack.c.l.b16 %v1432
    %v1593 = vunpack.c.l.b16 %v1433
    %v1594 = vunpack.c.l.b16 %v1434
    %v1595 = vunpack.c.l.b16 %v1435
    %v1596 = vunpack.c.l.b16 %v1436
    %v1597 = vunpack.c.l.b16 %v1437
    %v1598 = vunpack.c.l.b16 %v1438
    %v1599 = vunpack.c.l.b16 %v1439
    %v1600 = vunpack.c.l.b16 %v1440
    %v1601 = vunpack.c.l.b16 %v1441
    %v1602 = vunpack.c.l.b16 %v1442
    %v1603 = vunpack.c.l.b16 %v1443
    %v1604 = vunpack.c.l.b16 %v1444
    %v1605 = vunpack.c.l.b16 %v1445
    %v1606 = vunpack.c.l.b16 %v1446
    %v1607 = vunpack.c.l.b16 %v1447
    %v1608 = vunpack.c.l.b16 %v1448
    %v1609 = vunpack.c.l.b16 %v1449
    %v1610 = vunpack.c.l.b16 %v1450
    %v1611 = vunpack.c.l.b16 %v1451
    %v1612 = vunpack.c.l.b16 %v1452
    %v1613 = vunpack.c.l.b16 %v1453
    %v1614 = vunpack.c.l.b16 %v1454
    %v1615 = vunpack.c.l.b16 %v1455
    %v1616 = vunpack.c.l.b16 %v1456
    %v1617 = vunpack.c.l.b16 %v1457
    %v1618 = vunpack.c.l.b16 %v1458
    %v1619 = vunpack.c.l.b16 %v1459
    %v1620 = vunpack.c.l.b16 %v1460
    %v1621 = vunpack.c.l.b16 %v1461
    %v1622 = vunpack.c.l.b16 %v1462
    %v1623 = vunpack.c.l.b16 %v1463
    %v1624 = vunpack.c.l.b16 %v1464
    %v1625 = vunpack.c.l.b16 %v1465
    %v1626 = vunpack.c.l.b16 %v1466
    %v1627 = vunpack.c.l.b16 %v1467
    %v1628 = vunpack.c.l.b16 %v1468
    %v1629 = vunpack.c.l.b16 %v1469
    %v1630 = vunpack.c.l.b16 %v1470
    %v1631 = vunpack.c.l.b16 %v1471
    %v1632 = vunpack.c.l.b16 %v1472
    %v1633 = vpack.c.b16 %v1554, %v1553
    %v1634 = vpack.c.b16 %v1556, %v1555
    %v1635 = vpack.c.b16 %v1558, %v1557
    %v1636 = vpack.c.b16 %v1560, %v1559
    %v1637 = vpack.c.b16 %v1562, %v1561
    %v1638 = vpack.c.b16 %v1564, %v1563
    %v1639 = vpack.c.b16 %v1566, %v1565
    %v1640 = vpack.c.b16 %v1568, %v1567
    %v1641 = vpack.c.b16 %v1570, %v1569
    %v1642 = vpack.c.b16 %v1572, %v1571
    %v1643 = vpack.c.b16 %v1574, %v1573
    %v1644 = vpack.c.b16 %v1576, %v1575
    %v1645 = vpack.c.b16 %v1578, %v1577
    %v1646 = vpack.c.b16 %v1580, %v1579
    %v1647 = vpack.c.b16 %v1582, %v1581
    %v1648 = vpack.c.b16 %v1584, %v1583
    %v1649 = vpack.c.b16 %v1586, %v1585
    %v1650 = vpack.c.b16 %v1588, %v1587
    %v1651 = vpack.c.b16 %v1590, %v1589
    %v1652 = vpack.c.b16 %v1592, %v1591
    %v1653 = vpack.c.b16 %v1594, %v1593
    %v1654 = vpack.c.b16 %v1596, %v1595
    %v1655 = vpack.c.b16 %v1598, %v1597
    %v1656 = vpack.c.b16 %v1600, %v1599
    %v1657 = vpack.c.b16 %v1602, %v1601
    %v1658 = vpack.c.b16 %v1604, %v1603
    %v1659 = vpack.c.b16 %v1606, %v1605
    %v1660 = vpack.c.b16 %v1608, %v1607
    %v1661 = vpack.c.b16 %v1610, %v1609
    %v1662 = vpack.c.b16 %v1612, %v1611
    %v1663 = vpack.c.b16 %v1614, %v1613
    %v1664 = vpack.c.b16 %v1616, %v1615
    %v1665 = vpack.c.b16 %v1618, %v1617
    %v1666 = vpack.c.b16 %v1620, %v1619
    %v1667 = vpack.c.b16 %v1622, %v1621
    %v1668 = vpack.c.b16 %v1624, %v1623
    %v1669 = vpack.c.b16 %v1626, %v1625
    %v1670 = vpack.c.b16 %v1628, %v1627
    %v1671 = vpack.c.b16 %v1630, %v1629
    %v1672 = vpack.c.b16 %v1632, %v1631
    %1713 = vmatprep.subr.bf16.mxu0 0
    %1714 = vmatpush1.bf16.msra.mxu0 %v1633
    %1715 = vmatprep.subr.bf16.mxu0 0
    %1716 = vmatpush1.bf16.msra.mxu0 %v1634
    %1717 = vmatprep.subr.bf16.mxu0 0
    %1718 = vmatpush1.bf16.msra.mxu0 %v1635
    %1719 = vmatprep.subr.bf16.mxu0 0
    %1720 = vmatpush1.bf16.msra.mxu0 %v1636
    %1721 = vmatprep.subr.bf16.mxu0 0
    %1722 = vmatpush1.bf16.msra.mxu0 %v1637
    %1723 = vmatprep.subr.bf16.mxu0 0
    %1724 = vmatpush1.bf16.msra.mxu0 %v1638
    %1725 = vmatprep.subr.bf16.mxu0 0
    %1726 = vmatpush1.bf16.msra.mxu0 %v1639
    %1727 = vmatprep.subr.bf16.mxu0 0
    %1728 = vmatpush1.bf16.msra.mxu0 %v1640
    %1729 = vmatprep.subr.bf16.mxu0 0
    %1730 = vmatpush1.bf16.msra.mxu0 %v1641
    %1731 = vmatprep.subr.bf16.mxu0 0
    %1732 = vmatpush1.bf16.msra.mxu0 %v1642
    %1733 = vmatprep.subr.bf16.mxu0 0
    %1734 = vmatpush1.bf16.msra.mxu0 %v1643
    %1735 = vmatprep.subr.bf16.mxu0 0
    %1736 = vmatpush1.bf16.msra.mxu0 %v1644
    %1737 = vmatprep.subr.bf16.mxu0 0
    %1738 = vmatpush1.bf16.msra.mxu0 %v1645
    %1739 = vmatprep.subr.bf16.mxu0 0
    %1740 = vmatpush1.bf16.msra.mxu0 %v1646
    %1741 = vmatprep.subr.bf16.mxu0 0
    %1742 = vmatpush1.bf16.msra.mxu0 %v1647
    %1743 = vmatprep.subr.bf16.mxu0 0
    %1744 = vmatpush1.bf16.msra.mxu0 %v1648
    %1745 = vmatprep.mubr.bf16.mxu0 %v902
    %1746 = vmatmul.mubr.bf16.gmra.mrb[0].mxu0 %v898
    %v1747 = vpop.f32.mrb[0].mxu0
    %v1748 = vadd.f32 0.0, %v1747
    %v1749 = vpop.f32.mrb[0].mxu0
    %v1750 = vpop.f32.mrb[0].mxu0
    %v1751 = vpop.f32.mrb[0].mxu0
    %1752 = vdwg.mxu0
    %1753 = vmatprep.subr.bf16.mxu0 0
    %1754 = vmatpush1.bf16.msra.mxu0 %v1649
    %1755 = vmatprep.subr.bf16.mxu0 0
    %1756 = vmatpush1.bf16.msra.mxu0 %v1650
    %1757 = vmatprep.subr.bf16.mxu0 0
    %1758 = vmatpush1.bf16.msra.mxu0 %v1651
    %1759 = vmatprep.subr.bf16.mxu0 0
    %1760 = vmatpush1.bf16.msra.mxu0 %v1652
    %1761 = vmatprep.subr.bf16.mxu0 0
    %1762 = vmatpush1.bf16.msra.mxu0 %v1653
    %1763 = vmatprep.subr.bf16.mxu0 0
    %1764 = vmatpush1.bf16.msra.mxu0 %v1654
    %1765 = vmatprep.subr.bf16.mxu0 0
    %1766 = vmatpush1.bf16.msra.mxu0 %v1655
    %1767 = vmatprep.subr.bf16.mxu0 0
    %1768 = vmatpush1.bf16.msra.mxu0 %v1656
    %1769 = vmatprep.subr.bf16.mxu0 0
    %1770 = vmatpush1.bf16.msra.mxu0 %v1657
    %1771 = vmatprep.subr.bf16.mxu0 0
    %1772 = vmatpush1.bf16.msra.mxu0 %v1658
    %1773 = vmatprep.subr.bf16.mxu0 0
    %1774 = vmatpush1.bf16.msra.mxu0 %v1659
    %1775 = vmatprep.subr.bf16.mxu0 0
    %1776 = vmatpush1.bf16.msra.mxu0 %v1660
    %1777 = vmatprep.subr.bf16.mxu0 0
    %1778 = vmatpush1.bf16.msra.mxu0 %v1661
    %1779 = vmatprep.subr.bf16.mxu0 0
    %1780 = vmatpush1.bf16.msra.mxu0 %v1662
    %1781 = vmatprep.subr.bf16.mxu0 0
    %1782 = vmatpush1.bf16.msra.mxu0 %v1663
    %1783 = vmatprep.subr.bf16.mxu0 0
    %1784 = vmatpush1.bf16.msra.mxu0 %v1664
    %1785 = vmatprep.mubr.bf16.mxu0 %v910
    %1786 = vmatmul.mubr.bf16.gmra.mrb[0].mxu0 %v906
    %v1787 = vpop.f32.mrb[0].mxu0
    %v1788 = vadd.f32 %v1748, %v1787
    %v1789 = vpop.f32.mrb[0].mxu0
    %v1790 = vpop.f32.mrb[0].mxu0
    %v1791 = vpop.f32.mrb[0].mxu0
    %1792 = vdwg.mxu0
    %1793 = vmatprep.subr.bf16.mxu0 0
    %1794 = vmatpush1.bf16.msra.mxu0 %v1665
    %1795 = vmatprep.subr.bf16.mxu0 0
    %1796 = vmatpush1.bf16.msra.mxu0 %v1666
    %1797 = vmatprep.subr.bf16.mxu0 0
    %1798 = vmatpush1.bf16.msra.mxu0 %v1667
    %1799 = vmatprep.subr.bf16.mxu0 0
    %1800 = vmatpush1.bf16.msra.mxu0 %v1668
    %1801 = vmatprep.subr.bf16.mxu0 0
    %1802 = vmatpush1.bf16.msra.mxu0 %v1669
    %1803 = vmatprep.subr.bf16.mxu0 0
    %1804 = vmatpush1.bf16.msra.mxu0 %v1670
    %1805 = vmatprep.subr.bf16.mxu0 0
    %1806 = vmatpush1.bf16.msra.mxu0 %v1671
    %1807 = vmatprep.subr.bf16.mxu0 0
    %1808 = vmatpush1.bf16.msra.mxu0 %v1672
    %1809 = vmatprep.subr.bf16.mxu0 0
    %1810 = vmatpush1.bf16.msra.mxu0 0
    %1811 = vmatprep.subr.bf16.mxu0 0
    %1812 = vmatpush1.bf16.msra.mxu0 0
    %1813 = vmatprep.subr.bf16.mxu0 0
    %1814 = vmatpush1.bf16.msra.mxu0 0
    %1815 = vmatprep.subr.bf16.mxu0 0
    %1816 = vmatpush1.bf16.msra.mxu0 0
    %1817 = vmatprep.subr.bf16.mxu0 0
    %1818 = vmatpush1.bf16.msra.mxu0 0
    %1819 = vmatprep.subr.bf16.mxu0 0
    %1820 = vmatpush1.bf16.msra.mxu0 0
    %1821 = vmatprep.subr.bf16.mxu0 0
    %1822 = vmatpush1.bf16.msra.mxu0 0
    %1823 = vmatprep.subr.bf16.mxu0 0
    %1824 = vmatpush1.bf16.msra.mxu0 0
    %1825 = vmatprep.mubr.bf16.mxu0 0
    %1826 = vmatmul.mubr.bf16.gmra.mrb[0].mxu0 %v914
    %v1827 = vpop.f32.mrb[0].mxu0
    %v1828 = vadd.f32 %v1788, %v1827
    %v1829 = vpop.f32.mrb[0].mxu0
    %v1830 = vpop.f32.mrb[0].mxu0
    %v1831 = vpop.f32.mrb[0].mxu0
    %1832 = vdwg.mxu0
    %1833 = vst [vmem:[%s12] sm:$0x3] %v1828
    // Predicated region
    $region66: #{generator_forward.1} parent=1 // pred_check
      _
    $region67: #{generator_forward.1} parent=1 // pred_check_branch
      %1835 = sbr.rel (0) target = $region69
    $region68: #{generator_forward.1} parent=1 // pred_region
      _
    $region69: #{generator_forward.1} parent=1 // pred_fallthru
      _
    // Predicated region
    $region70: #{generator_forward.1} parent=1 // pred_check
      _
    $region71: #{generator_forward.1} parent=1 // pred_check_branch
      %1837 = sbr.rel (0) target = $region73
    $region72: #{generator_forward.1} parent=1 // pred_region
      _
    $region73: #{generator_forward.1} parent=1 // pred_fallthru
      _
    // Predicated region
    $region74: #{generator_forward.1} parent=1 // pred_check
      _
    $region75: #{generator_forward.1} parent=1 // pred_check_branch
      %1839 = sbr.rel (0) target = $region77
    $region76: #{generator_forward.1} parent=1 // pred_region
      _
    $region77: #{generator_forward.1} parent=1 // pred_fallthru
      _
    // Predicated region
    $region78: #{generator_forward.1} parent=1 // pred_check
      _
    $region79: #{generator_forward.1} parent=1 // pred_check_branch
      %1841 = sbr.rel (0) target = $region81
    $region80: #{generator_forward.1} parent=1 // pred_region
      _
    $region81: #{generator_forward.1} parent=1 // pred_fallthru
      _
    %1842 = vsyncpa [#allocation3], 1
    %1843 = vsyncpa [#allocation5], 1
    %1844 = vsyncpa [#allocation8], 1

</llo_original>
